<compile_context>
chip_gen: v7x
topology: tpu7x:2x2x1
jax: 0.10.0
libtpu: 0.0.40
codegen_flags: <defaults>
</compile_context>

<pallas_src>
import math

import jax
import jax.numpy as jnp
from jax.experimental import pallas as pl
from jax.experimental.pallas import tpu as pltpu


# ----------------------------------------------------------------------------
# Exact (erf-based) GELU, in-kernel.
# ----------------------------------------------------------------------------
def _erf(z):
    a1, a2, a3, a4, a5 = 0.254829592, -0.284496736, 1.421413741, -1.453152027, 1.061405429
    p = 0.3275911
    s = jnp.where(z >= 0.0, 1.0, -1.0)
    az = jnp.abs(z)
    t = 1.0 / (1.0 + p * az)
    poly = ((((a5 * t + a4) * t + a3) * t + a2) * t + a1) * t
    return s * (1.0 - poly * jnp.exp(-az * az))


def _gelu_exact(x):
    return 0.5 * x * (1.0 + _erf(x * (1.0 / math.sqrt(2.0))))


# ----------------------------------------------------------------------------
# Kernel: one grid point = (token tile i, hidden tile j).
#   h_j   = GELU(x_i @ W1[:, j] + b1[j])                (block_m, block_h)
#   acc  += h_j @ W2[j, :]                              (block_m, C)
#   at last j:  out_i = acc + b2
# ----------------------------------------------------------------------------
def mlp_kernel(x_ref, w1_ref, b1_ref, w2_ref, b2_ref, o_ref, acc_ref):
    j = pl.program_id(1)

    x_bf = x_ref[...].astype(jnp.bfloat16)                               # (bm, C)
    h = jnp.dot(x_bf, w1_ref[...], preferred_element_type=jnp.float32)   # (bm, bh) f32
    h = _gelu_exact(h + b1_ref[...])
    part = jnp.dot(h.astype(jnp.bfloat16), w2_ref[...],
                   preferred_element_type=jnp.float32)                   # (bm, C) f32

    @pl.when(j == 0)
    def _():
        acc_ref[...] = part

    @pl.when(j > 0)
    def _():
        acc_ref[...] += part

    @pl.when(j == pl.num_programs(1) - 1)
    def _():
        o_ref[...] = (acc_ref[...] + b2_ref[...]).astype(o_ref.dtype)


def mlp_pallas(x, w1, b1, w2, b2, *, block_m=256, block_h=256):
    """x: (..., C); w1: (C, H); b1: (H,); w2: (H, C_out); b2: (C_out,)."""
    orig_shape = x.shape
    C = orig_shape[-1]
    hidden = w1.shape[1]
    C_out = w2.shape[1]
    assert w1.shape == (C, hidden) and w2.shape == (hidden, C_out)

    # Token-major flatten.
    xf = x.reshape(-1, C).astype(jnp.float32)
    N = xf.shape[0]

    # Hidden-dim tile must divide H and be lane-aligned; otherwise take it whole.
    if hidden % block_h != 0 or block_h % 128 != 0:
        block_h = hidden
    # Pad the token dim up to a multiple of block_m.
    n_pad = (-N) % block_m
    if n_pad:
        xf = jnp.pad(xf, ((0, n_pad), (0, 0)))
    Np = N + n_pad
    grid = (Np // block_m, hidden // block_h)

    # Weights shipped in bf16 (MXU operand dtype); biases stay f32.
    w1b = w1.astype(jnp.bfloat16)
    w2b = w2.astype(jnp.bfloat16)
    b1r = b1.reshape(1, hidden).astype(jnp.float32)
    b2r = b2.reshape(1, C_out).astype(jnp.float32)

    cost = pl.CostEstimate(
        flops=2 * Np * hidden * (C + C_out),
        transcendentals=Np * hidden,                     # exp inside GELU/erf
        bytes_accessed=(xf.size * 4 + w1b.size * 2 + w2b.size * 2
                        + b1r.size * 4 + b2r.size * 4 + Np * C_out * 4),
    )

    out = pl.pallas_call(
        mlp_kernel,
        out_shape=jax.ShapeDtypeStruct((Np, C_out), jnp.float32),
        grid_spec=pltpu.PrefetchScalarGridSpec(
            num_scalar_prefetch=0,
            grid=grid,
            in_specs=[
                pl.BlockSpec((block_m, C), lambda i, j: (i, 0)),
                pl.BlockSpec((C, block_h), lambda i, j: (0, j)),
                pl.BlockSpec((1, block_h), lambda i, j: (0, j)),
                pl.BlockSpec((block_h, C_out), lambda i, j: (j, 0)),
                pl.BlockSpec((1, C_out), lambda i, j: (0, 0)),
            ],
            out_specs=pl.BlockSpec((block_m, C_out), lambda i, j: (i, 0)),
            scratch_shapes=[pltpu.VMEM((block_m, C_out), jnp.float32)],
        ),
        compiler_params=pltpu.CompilerParams(
            dimension_semantics=("parallel", "arbitrary")),
        cost_estimate=cost,
    )(xf, w1b, b1r, w2b, b2r)

    if n_pad:
        out = out[:N]
    return out.reshape(orig_shape[:-1] + (C_out,))


# ----------------------------------------------------------------------------
if __name__ == "__main__":
    # Small but MXU-friendly shapes: 512 tokens, C=128, hidden=4*C=512.
    B, L, C = 2, 256, 128
    hidden = 4 * C

    key = jax.random.PRNGKey(0)
    kx, k1, k2, k3, k4 = jax.random.split(key, 5)

    x = jax.random.normal(kx, (B, L, C), dtype=jnp.float32)

    def lin_w(k, fan_in, fan_out):
        bound = 1.0 / math.sqrt(fan_in)
        return jax.random.uniform(k, (fan_in, fan_out), jnp.float32, -bound, bound)

    def lin_b(k, fan_in, fan_out):
        bound = 1.0 / math.sqrt(fan_in)
        return jax.random.uniform(k, (fan_out,), jnp.float32, -bound, bound)

    w1 = lin_w(k1, C, hidden)
    b1 = lin_b(k2, C, hidden)
    w2 = lin_w(k3, hidden, C)
    b2 = lin_b(k4, hidden, C)

    out = jax.block_until_ready(
        mlp_pallas(x, w1, b1, w2, b2, block_m=256, block_h=256))

    # Reference 1: same operand precision as the kernel (bf16 operands, f32 acc)
    # -> tight check of the kernel's tiling/accumulation logic.
    xb = x.astype(jnp.bfloat16)
    h_m = jnp.dot(xb, w1.astype(jnp.bfloat16),
                  preferred_element_type=jnp.float32) + b1
    h_m = jax.nn.gelu(h_m, approximate=False)
    ref_m = jnp.dot(h_m.astype(jnp.bfloat16), w2.astype(jnp.bfloat16),
                    preferred_element_type=jnp.float32) + b2
    ref_m = jax.block_until_ready(ref_m)

    # Reference 2: pure fp32 -> sanity check that bf16 operands stay in tolerance.
    h_f = jax.nn.gelu(x @ w1 + b1, approximate=False)
    ref_f = jax.block_until_ready(h_f @ w2 + b2)

    assert out.shape == (B, L, C)
    tight_err = float(jnp.max(jnp.abs(out - ref_m)))
    loose_err = float(jnp.max(jnp.abs(out - ref_f)))
    scale = float(jnp.max(jnp.abs(ref_f))) + 1e-6
    assert tight_err < 1e-3, f"kernel-logic mismatch vs bf16 reference: {tight_err}"
    assert loose_err / scale < 3e-2, f"numeric drift vs fp32 reference: {loose_err / scale}"

    print("KERNEL_OK")
</pallas_src>

<mosaic_0001>
module attributes {stable_mosaic.version = 11 : i64} {
  func.func @mlp_kernel(%arg0: i32, %arg1: i32, %arg2: memref<256x128xf32, #tpu.memory_space<vmem>>, %arg3: memref<128x256xbf16, #tpu.memory_space<vmem>>, %arg4: memref<1x256xf32, #tpu.memory_space<vmem>>, %arg5: memref<256x128xbf16, #tpu.memory_space<vmem>>, %arg6: memref<1x128xf32, #tpu.memory_space<vmem>>, %arg7: memref<256x128xf32, #tpu.memory_space<vmem>>, %arg8: memref<256x128xf32, #tpu.memory_space<vmem>>) attributes {dimension_semantics = [#tpu.dimension_semantics<parallel>, #tpu.dimension_semantics<arbitrary>], iteration_bounds = array<i64: 2, 2>, scalar_prefetch = 0 : i64, scratch_operands = 1 : i64, tpu.core_type = #tpu.core_type<tc>, window_params = [{transform_indices = @transform_0, window_bounds = array<i64: 256, 128>}, {transform_indices = @transform_1, window_bounds = array<i64: 128, 256>}, {transform_indices = @transform_2, window_bounds = array<i64: 1, 256>}, {transform_indices = @transform_3, window_bounds = array<i64: 256, 128>}, {pipeline_mode = #tpu.pipeline_mode<synchronous>, transform_indices = @transform_4, window_bounds = array<i64: 1, 128>}, {transform_indices = @transform_5, window_bounds = array<i64: 256, 128>}]} {
    %c0 = arith.constant 0 : index
    %c0_0 = arith.constant 0 : index
    %0 = vector.load %arg2[%c0, %c0_0] : memref<256x128xf32, #tpu.memory_space<vmem>>, vector<256x128xf32>
    %1 = arith.truncf %0 : vector<256x128xf32> to vector<256x128xbf16>
    %c0_1 = arith.constant 0 : index
    %c0_2 = arith.constant 0 : index
    %2 = vector.load %arg3[%c0_1, %c0_2] : memref<128x256xbf16, #tpu.memory_space<vmem>>, vector<128x256xbf16>
    %cst = arith.constant dense<0.000000e+00> : vector<256x256xf32>
    %3 = tpu.matmul %1, %2, %cst {dimension_numbers = #tpu.dot_dimension_numbers<[1], [0], [0], [1], [0, 0, 1, 1], [], []>} : vector<256x128xbf16>, vector<128x256xbf16>, vector<256x256xf32> -> vector<256x256xf32>
    %c0_3 = arith.constant 0 : index
    %c0_4 = arith.constant 0 : index
    %4 = vector.load %arg4[%c0_3, %c0_4] : memref<1x256xf32, #tpu.memory_space<vmem>>, vector<1x256xf32>
    %5 = vector.broadcast %4 : vector<1x256xf32> to vector<256x256xf32>
    %6 = arith.addf %3, %5 : vector<256x256xf32>
    %cst_5 = arith.constant 5.000000e-01 : f32
    %7 = vector.broadcast %cst_5 : f32 to vector<256x256xf32>
    %8 = arith.mulf %7, %6 : vector<256x256xf32>
    %cst_6 = arith.constant 0.707106769 : f32
    %9 = vector.broadcast %cst_6 : f32 to vector<256x256xf32>
    %10 = arith.mulf %6, %9 : vector<256x256xf32>
    %cst_7 = arith.constant 0.000000e+00 : f32
    %11 = vector.broadcast %cst_7 : f32 to vector<256x256xf32>
    %12 = arith.cmpf oge, %10, %11 : vector<256x256xf32>
    %cst_8 = arith.constant 1.000000e+00 : f32
    %cst_9 = arith.constant -1.000000e+00 : f32
    %13 = vector.broadcast %cst_8 : f32 to vector<256x256xf32>
    %14 = vector.broadcast %cst_9 : f32 to vector<256x256xf32>
    %15 = arith.select %12, %13, %14 : vector<256x256xi1>, vector<256x256xf32>
    %16 = math.absf %10 : vector<256x256xf32>
    %cst_10 = arith.constant 0.327591091 : f32
    %17 = vector.broadcast %cst_10 : f32 to vector<256x256xf32>
    %18 = arith.mulf %17, %16 : vector<256x256xf32>
    %cst_11 = arith.constant 1.000000e+00 : f32
    %19 = vector.broadcast %cst_11 : f32 to vector<256x256xf32>
    %20 = arith.addf %19, %18 : vector<256x256xf32>
    %cst_12 = arith.constant 1.000000e+00 : f32
    %21 = vector.broadcast %cst_12 : f32 to vector<256x256xf32>
    %22 = arith.divf %21, %20 : vector<256x256xf32>
    %cst_13 = arith.constant 1.06140542 : f32
    %23 = vector.broadcast %cst_13 : f32 to vector<256x256xf32>
    %24 = arith.mulf %23, %22 : vector<256x256xf32>
    %cst_14 = arith.constant -1.45315206 : f32
    %25 = vector.broadcast %cst_14 : f32 to vector<256x256xf32>
    %26 = arith.addf %24, %25 : vector<256x256xf32>
    %27 = arith.mulf %26, %22 : vector<256x256xf32>
    %cst_15 = arith.constant 1.42141378 : f32
    %28 = vector.broadcast %cst_15 : f32 to vector<256x256xf32>
    %29 = arith.addf %27, %28 : vector<256x256xf32>
    %30 = arith.mulf %29, %22 : vector<256x256xf32>
    %cst_16 = arith.constant -0.284496725 : f32
    %31 = vector.broadcast %cst_16 : f32 to vector<256x256xf32>
    %32 = arith.addf %30, %31 : vector<256x256xf32>
    %33 = arith.mulf %32, %22 : vector<256x256xf32>
    %cst_17 = arith.constant 0.254829586 : f32
    %34 = vector.broadcast %cst_17 : f32 to vector<256x256xf32>
    %35 = arith.addf %33, %34 : vector<256x256xf32>
    %36 = arith.mulf %35, %22 : vector<256x256xf32>
    %cst_18 = arith.constant 0.000000e+00 : f32
    %37 = vector.broadcast %cst_18 : f32 to vector<256x256xf32>
    %38 = arith.subf %37, %16 : vector<256x256xf32>
    %39 = arith.mulf %38, %16 : vector<256x256xf32>
    %40 = math.exp %39 : vector<256x256xf32>
    %41 = arith.mulf %36, %40 : vector<256x256xf32>
    %cst_19 = arith.constant 1.000000e+00 : f32
    %42 = vector.broadcast %cst_19 : f32 to vector<256x256xf32>
    %43 = arith.subf %42, %41 : vector<256x256xf32>
    %44 = arith.mulf %15, %43 : vector<256x256xf32>
    %cst_20 = arith.constant 1.000000e+00 : f32
    %45 = vector.broadcast %cst_20 : f32 to vector<256x256xf32>
    %46 = arith.addf %45, %44 : vector<256x256xf32>
    %47 = arith.mulf %8, %46 : vector<256x256xf32>
    %48 = arith.truncf %47 : vector<256x256xf32> to vector<256x256xbf16>
    %c0_21 = arith.constant 0 : index
    %c0_22 = arith.constant 0 : index
    %49 = vector.load %arg5[%c0_21, %c0_22] : memref<256x128xbf16, #tpu.memory_space<vmem>>, vector<256x128xbf16>
    %cst_23 = arith.constant dense<0.000000e+00> : vector<256x128xf32>
    %50 = tpu.matmul %48, %49, %cst_23 {dimension_numbers = #tpu.dot_dimension_numbers<[1], [0], [0], [1], [0, 0, 1, 1], [], []>} : vector<256x256xbf16>, vector<256x128xbf16>, vector<256x128xf32> -> vector<256x128xf32>
    %c0_i32 = arith.constant 0 : i32
    %51 = arith.cmpi eq, %arg1, %c0_i32 : i32
    %52 = arith.extui %51 : i1 to i32
    %c0_i32_24 = arith.constant 0 : i32
    %53 = arith.cmpi ne, %52, %c0_i32_24 : i32
    scf.if %53 {
      %c0_28 = arith.constant 0 : index
      %c0_29 = arith.constant 0 : index
      %60 = vector.load %arg8[%c0_28, %c0_29] : memref<256x128xf32, #tpu.memory_space<vmem>>, vector<256x128xf32>
      tpu.vector_store %arg8[%c0_28, %c0_29], %50 {strides = array<i32>} : memref<256x128xf32, #tpu.memory_space<vmem>>, vector<256x128xf32>,
    } else {
    }
    %c0_i32_25 = arith.constant 0 : i32
    %54 = arith.cmpi sgt, %arg1, %c0_i32_25 : i32
    %55 = arith.extui %54 : i1 to i32
    %c0_i32_26 = arith.constant 0 : i32
    %56 = arith.cmpi ne, %55, %c0_i32_26 : i32
    scf.if %56 {
      %c0_28 = arith.constant 0 : index
      %c0_29 = arith.constant 0 : index
      %60 = vector.load %arg8[%c0_28, %c0_29] : memref<256x128xf32, #tpu.memory_space<vmem>>, vector<256x128xf32>
      %61 = arith.addf %60, %50 : vector<256x128xf32>
      %c0_30 = arith.constant 0 : index
      %c0_31 = arith.constant 0 : index
      %62 = vector.load %arg8[%c0_30, %c0_31] : memref<256x128xf32, #tpu.memory_space<vmem>>, vector<256x128xf32>
      tpu.vector_store %arg8[%c0_30, %c0_31], %61 {strides = array<i32>} : memref<256x128xf32, #tpu.memory_space<vmem>>, vector<256x128xf32>,
    } else {
    }
    %c1_i32 = arith.constant 1 : i32
    %57 = arith.cmpi eq, %arg1, %c1_i32 : i32
    %58 = arith.extui %57 : i1 to i32
    %c0_i32_27 = arith.constant 0 : i32
    %59 = arith.cmpi ne, %58, %c0_i32_27 : i32
    scf.if %59 {
      %c0_28 = arith.constant 0 : index
      %c0_29 = arith.constant 0 : index
      %60 = vector.load %arg8[%c0_28, %c0_29] : memref<256x128xf32, #tpu.memory_space<vmem>>, vector<256x128xf32>
      %c0_30 = arith.constant 0 : index
      %c0_31 = arith.constant 0 : index
      %61 = vector.load %arg6[%c0_30, %c0_31] : memref<1x128xf32, #tpu.memory_space<vmem>>, vector<1x128xf32>
      %62 = vector.broadcast %61 : vector<1x128xf32> to vector<256x128xf32>
      %63 = arith.addf %60, %62 : vector<256x128xf32>
      %c0_32 = arith.constant 0 : index
      %c0_33 = arith.constant 0 : index
      %64 = vector.load %arg7[%c0_32, %c0_33] : memref<256x128xf32, #tpu.memory_space<vmem>>, vector<256x128xf32>
      tpu.vector_store %arg7[%c0_32, %c0_33], %63 {strides = array<i32>} : memref<256x128xf32, #tpu.memory_space<vmem>>, vector<256x128xf32>,
    } else {
    }
    return
  }
  func.func @transform_0(%arg0: i32, %arg1: i32) -> (i32, i32) {
    %c0_i32 = arith.constant 0 : i32
    %c0_i32_0 = arith.constant 0 : i32
    return %arg0, %c0_i32 : i32, i32
  }
  func.func @transform_1(%arg0: i32, %arg1: i32) -> (i32, i32) {
    %c0_i32 = arith.constant 0 : i32
    %c0_i32_0 = arith.constant 0 : i32
    return %c0_i32, %arg1 : i32, i32
  }
  func.func @transform_2(%arg0: i32, %arg1: i32) -> (i32, i32) {
    %c0_i32 = arith.constant 0 : i32
    %c0_i32_0 = arith.constant 0 : i32
    return %c0_i32, %arg1 : i32, i32
  }
  func.func @transform_3(%arg0: i32, %arg1: i32) -> (i32, i32) {
    %c0_i32 = arith.constant 0 : i32
    %c0_i32_0 = arith.constant 0 : i32
    return %arg1, %c0_i32 : i32, i32
  }
  func.func @transform_4(%arg0: i32, %arg1: i32) -> (i32, i32) {
    %c0_i32 = arith.constant 0 : i32
    %c0_i32_0 = arith.constant 0 : i32
    %c0_i32_1 = arith.constant 0 : i32
    return %c0_i32, %c0_i32_0 : i32, i32
  }
  func.func @transform_5(%arg0: i32, %arg1: i32) -> (i32, i32) {
    %c0_i32 = arith.constant 0 : i32
    %c0_i32_0 = arith.constant 0 : i32
    return %arg0, %c0_i32 : i32, i32
  }
}

</mosaic_0001>

<llo_original>
// kernel: tpu_custom_call.1
$region0: #{tpu_custom_call.1}
  #allocation0 [shape = 'u32[]', space=smem, size = 0x4, offset = 0x4, fixed_abs, tag = 'smem constant byte address 0x4 - core index']
  #allocation1 [shape = 'u32[144,128]{1,0:T(1,128)}', space=vmem, size = 0x12000, scoped, tag = 'internal scratch']
  #allocation2 [shape = 'f32[256,128]{1,0:T(8,128)}', space=vmem, size = 0x20000, scoped, tag = 'scratch operand']
  %s0 = inlined_call_operand.hbm [shape: f32[512,128], index: 0, kind: input, shape index: {}]
  %s1 = inlined_call_operand.hbm [shape: bf16[128,512], index: 1, kind: input, shape index: {}]
  %s2 = inlined_call_operand.vmem [shape: f32[1,512], index: 2, kind: input, shape index: {}]
  %s3 = inlined_call_operand.hbm [shape: bf16[512,128], index: 3, kind: input, shape index: {}]
  %s4 = inlined_call_operand.vmem [shape: f32[1,128], index: 4, kind: input, shape index: {}]
  %s5 = inlined_call_operand.hbm [shape: f32[512,128], index: 5, kind: output, shape index: {}]
  %s6 = sld [smem:[#allocation0]]
  $region77: #{tpu_custom_call.1} parent=0
    _
  %s8 = ssub.s32 1, %s6
  %s9 = scalar_select 0, %s8, %s6
  $region1: #{tpu_custom_call.1} parent=0
    #allocation3 [shape = 'u8[262144]{0}', space=vmem, size = 0x40000, scoped, tag = 'input window, operand 0']
    #allocation4 [shape = 's32[2]{0}', space=sflag, size = 0x8, scoped, tag = 'scoped memory for tpu_custom_call.1']
    #allocation5 [shape = 's32[2]{0}', space=sflag, size = 0x8, scoped, tag = 'scoped memory for tpu_custom_call.1']
    #allocation6 [shape = 'u8[131072]{0}', space=vmem, size = 0x20000, scoped, tag = 'input window, operand 1']
    #allocation7 [shape = 's32[2]{0}', space=sflag, size = 0x8, scoped, tag = 'scoped memory for tpu_custom_call.1']
    #allocation8 [shape = 'u8[131072]{0}', space=vmem, size = 0x20000, scoped, tag = 'input window, operand 3']
    #allocation9 [shape = 'u8[262144]{0}', space=vmem, size = 0x40000, scoped, tag = 'output window, operand 0']
    %10 = vsyncpa [#allocation4], 0
    %s11 = scalar_lea.sflag [#allocation4], 1
    %12 = vsyncpa %s11, 0
    %13 = vsyncpa [#allocation7], 0
    %s14 = scalar_lea.sflag [#allocation7], 1
    %15 = vsyncpa %s14, 0
    %16 = vsyncpa [#allocation5], 0
    %s17 = scalar_lea.sflag [#allocation5], 1
    %18 = vsyncpa %s17, 0
    loop: start=0, step=1, limit=6
    $region2: #{tpu_custom_call.1} parent=1 // loop_pre_header
      _
    $region3: #{tpu_custom_call.1} parent=1 // loop_header
      %s20 = sphi 0, %s24
      %p21 = scmp.ge.s32.totalorder %s20, 6
      %s27 = sphi 0, %s39
      %s28 = sphi 0, %s35
      %s29 = sphi 0, %s27
      %s30 = sphi 0, %s28
      %s31 = sphi 0, %s29
      %s32 = sphi 0, %s30
      %s42 = sphi 0, %s44
      %s45 = sphi 0, %s42
      %s46 = sphi 0, %s45
      %s62 = sphi 0, %s46
      %s68 = sphi 0, %s70
      %s71 = sphi 0, %s68
      %s72 = sphi 0, %s71
      %s88 = sphi 0, %s72
      %s94 = sphi 0, %s96
      %s97 = sphi 0, %s94
      %s98 = sphi 0, %s97
      %s114 = sphi 0, %s98
      %s120 = sphi 0, %s122
      %s123 = sphi 0, %s120
      %s124 = sphi 0, %s123
      %s140 = sphi 0, %s124
      %s144 = sphi 0, %s144
      %s146 = sphi 0, %s144
      %s147 = sphi 0, %s146
      %s161 = sphi 0, %s147
      %s167 = sphi 0, %s169
      %s170 = sphi 0, %s167
      %s171 = sphi 0, %s170
      %s187 = sphi 0, %s171
    $region4: #{tpu_custom_call.1} parent=1 // loop_header_branch
      %23 = sbr.rel (%p21) target = $region8
    $region5: #{tpu_custom_call.1} parent=1 // loop_body
      %s25 = ssub.s32 %s20, 1
      %s26 = ssub.s32 %s20, 2
      %s33 = sadd.s32 1, %s28
      %p34 = scmp.ge.s32.totalorder %s33, 2
      %s35 = scalar_select %p34, 0, %s33
      %s36 = sadd.s32 1, %s27
      %s37 = scalar_select %p34, %s36, %s27
      %p38 = scmp.ge.s32.totalorder %s37, 2
      %s39 = scalar_select %p38, 0, %s37
      %s40 = ssub.s32 %s27, %s39
      %p41 = scmp.eq.s32.totalorder %s40, 0
      %s43 = sadd.s32 %s42, 1
      %s44 = scalar_select %p41, %s42, %s43
      %p47 = pneg %p41
      %p48 = scmp.eq.s32.totalorder %s20, 3
      %p49 = por %p47, %p48
      %p50 = scmp.ne.s32.totalorder %s42, %s45
      %p51 = scmp.eq.s32.totalorder %s20, 0
      %p52 = por %p50, %p51
      %p53 = scmp.ne.s32.totalorder %s42, %s45
      %p54 = scmp.eq.s32.totalorder %s25, 3
      %p55 = por %p53, %p54
      %p56 = scmp.ne.s32.totalorder %s45, %s46
      %p57 = scmp.eq.s32.totalorder %s25, 0
      %p58 = por %p56, %p57
      %p59 = scmp.ne.s32.totalorder %s45, %s46
      %p60 = scmp.eq.s32.totalorder %s26, 3
      %p61 = por %p59, %p60
      %p63 = scmp.ne.s32.totalorder %s46, %s62
      %p64 = scmp.eq.s32.totalorder %s26, 0
      %p65 = por %p63, %p64
      %s66 = ssub.s32 %s28, %s35
      %p67 = scmp.eq.s32.totalorder %s66, 0
      %s69 = sadd.s32 %s68, 1
      %s70 = scalar_select %p67, %s68, %s69
      %p73 = pneg %p67
      %p74 = scmp.eq.s32.totalorder %s20, 3
      %p75 = por %p73, %p74
      %p76 = scmp.ne.s32.totalorder %s68, %s71
      %p77 = scmp.eq.s32.totalorder %s20, 0
      %p78 = por %p76, %p77
      %p79 = scmp.ne.s32.totalorder %s68, %s71
      %p80 = scmp.eq.s32.totalorder %s25, 3
      %p81 = por %p79, %p80
      %p82 = scmp.ne.s32.totalorder %s71, %s72
      %p83 = scmp.eq.s32.totalorder %s25, 0
      %p84 = por %p82, %p83
      %p85 = scmp.ne.s32.totalorder %s71, %s72
      %p86 = scmp.eq.s32.totalorder %s26, 3
      %p87 = por %p85, %p86
      %p89 = scmp.ne.s32.totalorder %s72, %s88
      %p90 = scmp.eq.s32.totalorder %s26, 0
      %p91 = por %p89, %p90
      %s92 = ssub.s32 %s28, %s35
      %p93 = scmp.eq.s32.totalorder %s92, 0
      %s95 = sadd.s32 %s94, 1
      %s96 = scalar_select %p93, %s94, %s95
      %p99 = pneg %p93
      %p100 = scmp.eq.s32.totalorder %s20, 3
      %p101 = por %p99, %p100
      %p102 = scmp.ne.s32.totalorder %s94, %s97
      %p103 = scmp.eq.s32.totalorder %s20, 0
      %p104 = por %p102, %p103
      %p105 = scmp.ne.s32.totalorder %s94, %s97
      %p106 = scmp.eq.s32.totalorder %s25, 3
      %p107 = por %p105, %p106
      %p108 = scmp.ne.s32.totalorder %s97, %s98
      %p109 = scmp.eq.s32.totalorder %s25, 0
      %p110 = por %p108, %p109
      %p111 = scmp.ne.s32.totalorder %s97, %s98
      %p112 = scmp.eq.s32.totalorder %s26, 3
      %p113 = por %p111, %p112
      %p115 = scmp.ne.s32.totalorder %s98, %s114
      %p116 = scmp.eq.s32.totalorder %s26, 0
      %p117 = por %p115, %p116
      %s118 = ssub.s32 %s28, %s35
      %p119 = scmp.eq.s32.totalorder %s118, 0
      %s121 = sadd.s32 %s120, 1
      %s122 = scalar_select %p119, %s120, %s121
      %p125 = pneg %p119
      %p126 = scmp.eq.s32.totalorder %s20, 3
      %p127 = por %p125, %p126
      %p128 = scmp.ne.s32.totalorder %s120, %s123
      %p129 = scmp.eq.s32.totalorder %s20, 0
      %p130 = por %p128, %p129
      %p131 = scmp.ne.s32.totalorder %s120, %s123
      %p132 = scmp.eq.s32.totalorder %s25, 3
      %p133 = por %p131, %p132
      %p134 = scmp.ne.s32.totalorder %s123, %s124
      %p135 = scmp.eq.s32.totalorder %s25, 0
      %p136 = por %p134, %p135
      %p137 = scmp.ne.s32.totalorder %s123, %s124
      %p138 = scmp.eq.s32.totalorder %s26, 3
      %p139 = por %p137, %p138
      %p141 = scmp.ne.s32.totalorder %s124, %s140
      %p142 = scmp.eq.s32.totalorder %s26, 0
      %p143 = por %p141, %p142
      %s145 = sadd.s32 %s144, 1
      %p148 = scmp.eq.s32.totalorder %s20, 3
      %p149 = scmp.ne.s32.totalorder %s144, %s146
      %p150 = scmp.eq.s32.totalorder %s20, 0
      %p151 = por %p149, %p150
      %p152 = scmp.ne.s32.totalorder %s144, %s146
      %p153 = scmp.eq.s32.totalorder %s25, 3
      %p154 = por %p152, %p153
      %p155 = scmp.ne.s32.totalorder %s146, %s147
      %p156 = scmp.eq.s32.totalorder %s25, 0
      %p157 = por %p155, %p156
      %p158 = scmp.ne.s32.totalorder %s146, %s147
      %p159 = scmp.eq.s32.totalorder %s26, 3
      %p160 = por %p158, %p159
      %p162 = scmp.ne.s32.totalorder %s147, %s161
      %p163 = scmp.eq.s32.totalorder %s26, 0
      %p164 = por %p162, %p163
      %s165 = ssub.s32 %s27, %s39
      %p166 = scmp.eq.s32.totalorder %s165, 0
      %s168 = sadd.s32 %s167, 1
      %s169 = scalar_select %p166, %s167, %s168
      %p172 = pneg %p166
      %p173 = scmp.eq.s32.totalorder %s20, 3
      %p174 = por %p172, %p173
      %p175 = scmp.ne.s32.totalorder %s167, %s170
      %p176 = scmp.eq.s32.totalorder %s20, 0
      %p177 = por %p175, %p176
      %p178 = scmp.ne.s32.totalorder %s167, %s170
      %p179 = scmp.eq.s32.totalorder %s25, 3
      %p180 = por %p178, %p179
      %p181 = scmp.ne.s32.totalorder %s170, %s171
      %p182 = scmp.eq.s32.totalorder %s25, 0
      %p183 = por %p181, %p182
      %p184 = scmp.ne.s32.totalorder %s170, %s171
      %p185 = scmp.eq.s32.totalorder %s26, 3
      %p186 = por %p184, %p185
      %p188 = scmp.ne.s32.totalorder %s171, %s187
      %p189 = scmp.eq.s32.totalorder %s26, 0
      %p190 = por %p188, %p189
      %p191 = scmp.le.s32.totalorder 1, %s20
      %p192 = scmp.lt.s32.totalorder %s20, 5
      %p193 = pnand %p191, %p192
      %p194 = pneg %p193
      // Predicated region
      $region9: #{tpu_custom_call.1} parent=5 // pred_check
        _
      $region10: #{tpu_custom_call.1} parent=5 // pred_check_branch
        %196 = sbr.rel (%p193) target = $region12
      $region11: #{tpu_custom_call.1} parent=5 // pred_region
        %s197 = ssub.s32 %s20, 1
        // Predicated region
        $region13: #{tpu_custom_call.1} parent=11 // pred_check
          %p198 = pneg %p157
        $region14: #{tpu_custom_call.1} parent=11 // pred_check_branch
          %200 = sbr.rel (%p198) target = $region16
        $region15: #{tpu_custom_call.1} parent=11 // pred_region
          _
        $region16: #{tpu_custom_call.1} parent=11 // pred_fallthru
          _
      $region12: #{tpu_custom_call.1} parent=5 // pred_fallthru
        _
      %p201 = scmp.lt.s32.totalorder %s20, 4
      // Predicated region
      $region17: #{tpu_custom_call.1} parent=5 // pred_check
        %p202 = pneg %p201
      $region18: #{tpu_custom_call.1} parent=5 // pred_check_branch
        %204 = sbr.rel (%p202) target = $region20
      $region19: #{tpu_custom_call.1} parent=5 // pred_region
        // Predicated region
        $region21: #{tpu_custom_call.1} parent=19 // pred_check
          %p205 = pneg %p52
        $region22: #{tpu_custom_call.1} parent=19 // pred_check_branch
          %207 = sbr.rel (%p205) target = $region24
        $region23: #{tpu_custom_call.1} parent=19 // pred_region
          %s208 = sand.u32 %s42, 1
          %s209 = scalar_lea.sflag [#allocation4], %s208
          %s210 = sand.u32 %s42, 1
          %s211 = smul.addr %s210, 256
          %s212 = scalar_lea.vmem [#allocation3], %s211
          %s213 = smul.u32 32, %s27
          %s215 = ssub.s32 4096, 4096
          %216 = vsyncadd %s209, %s215
          %s217 = smul.addr %s213, 128
          %s218 = scalar_lea.hbm %s0, %s217
          %s219 = sshll.u32 %s212, 4
          %s220 = int_to_ptr.vmem [resolvable:$true] %s219
          %225 = dma.hbm_to_vmem [thread:$0]  %s218, 4096, %s220, %s209, 128, 128, 8
        $region24: #{tpu_custom_call.1} parent=19 // pred_fallthru
          _
        // Predicated region
        $region25: #{tpu_custom_call.1} parent=19 // pred_check
          %p226 = pneg %p78
        $region26: #{tpu_custom_call.1} parent=19 // pred_check_branch
          %228 = sbr.rel (%p226) target = $region28
        $region27: #{tpu_custom_call.1} parent=19 // pred_region
          %s229 = sand.u32 %s20, 1
          %s230 = scalar_lea.sflag [#allocation7], %s229
          %s231 = sand.u32 %s68, 1
          %s232 = smul.addr %s231, 128
          %s233 = scalar_lea.vmem [#allocation6], %s232
          %s234 = smul.u32 2, %s28
          %s236 = ssub.s32 2048, 2048
          %237 = vsyncadd %s230, %s236
          %s238 = smul.addr %s234, 64
          %s239 = scalar_lea.hbm %s1, %s238
          %s240 = sshll.u32 %s233, 4
          %s241 = int_to_ptr.vmem [resolvable:$true] %s240
          %246 = dma.hbm_to_vmem [thread:$0]  %s239, 2048, %s241, %s230, 256, 128, 8
        $region28: #{tpu_custom_call.1} parent=19 // pred_fallthru
          _
        // Predicated region
        $region29: #{tpu_custom_call.1} parent=19 // pred_check
          %p247 = pneg %p104
        $region30: #{tpu_custom_call.1} parent=19 // pred_check_branch
          %249 = sbr.rel (%p247) target = $region32
        $region31: #{tpu_custom_call.1} parent=19 // pred_region
          %s250 = smul.u32 2, %s28
          %p251 = scmp.lt.s32.totalorder %s250, 3
          %s252 = scalar_select %p251, %s250, 3
          %s253 = scalar_lea.vmem %s2, %s252
          %s254 = smul.u32 2, %s28
        $region32: #{tpu_custom_call.1} parent=19 // pred_fallthru
          _
        // Predicated region
        $region33: #{tpu_custom_call.1} parent=19 // pred_check
          %p255 = pneg %p130
        $region34: #{tpu_custom_call.1} parent=19 // pred_check_branch
          %257 = sbr.rel (%p255) target = $region36
        $region35: #{tpu_custom_call.1} parent=19 // pred_region
          %s258 = sand.u32 %s20, 1
          %s259 = scalar_lea.sflag [#allocation7], %s258
          %s260 = sand.u32 %s120, 1
          %s261 = smul.addr %s260, 128
          %s262 = scalar_lea.vmem [#allocation8], %s261
          %s263 = smul.u32 32, %s28
          %s265 = ssub.s32 2048, 2048
          %266 = vsyncadd %s259, %s265
          %s267 = smul.addr %s263, 64
          %s268 = scalar_lea.hbm %s3, %s267
          %s269 = sshll.u32 %s262, 4
          %s270 = int_to_ptr.vmem [resolvable:$true] %s269
          %275 = dma.hbm_to_vmem [thread:$0]  %s268, 2048, %s270, %s259, 64, 64, 4
        $region36: #{tpu_custom_call.1} parent=19 // pred_fallthru
          _
      $region20: #{tpu_custom_call.1} parent=5 // pred_fallthru
        _
      %p276 = scmp.le.s32.totalorder 1, %s20
      %p277 = scmp.lt.s32.totalorder %s20, 5
      %p278 = pnand %p276, %p277
      %p279 = pneg %p278
      // Predicated region
      $region37: #{tpu_custom_call.1} parent=5 // pred_check
        _
      $region38: #{tpu_custom_call.1} parent=5 // pred_check_branch
        %281 = sbr.rel (%p278) target = $region40
      $region39: #{tpu_custom_call.1} parent=5 // pred_region
        %s282 = ssub.s32 %s20, 1
        %s283 = sand.u32 %s45, 1
        %s284 = scalar_lea.sflag [#allocation4], %s283
        %s285 = sand.u32 %s45, 1
        %s286 = smul.addr %s285, 256
        %s287 = scalar_lea.vmem [#allocation3], %s286
        // Predicated region
        $region41: #{tpu_custom_call.1} parent=39 // pred_check
          %p288 = pneg %p58
        $region42: #{tpu_custom_call.1} parent=39 // pred_check_branch
          %290 = sbr.rel (%p288) target = $region44
        $region43: #{tpu_custom_call.1} parent=39 // pred_region
          %291 = dma.done %s284, 4096
        $region44: #{tpu_custom_call.1} parent=39 // pred_fallthru
          _
        %s292 = sand.u32 %s25, 1
        %s293 = scalar_lea.sflag [#allocation7], %s292
        %s294 = sand.u32 %s71, 1
        %s295 = smul.addr %s294, 128
        %s296 = scalar_lea.vmem [#allocation6], %s295
        // Predicated region
        $region45: #{tpu_custom_call.1} parent=39 // pred_check
          %p297 = pneg %p84
        $region46: #{tpu_custom_call.1} parent=39 // pred_check_branch
          %299 = sbr.rel (%p297) target = $region48
        $region47: #{tpu_custom_call.1} parent=39 // pred_region
          %300 = dma.done %s293, 2048
        $region48: #{tpu_custom_call.1} parent=39 // pred_fallthru
          _
        %s301 = sand.u32 %s25, 1
        %s302 = scalar_lea.sflag [#allocation7], %s301
        %s303 = sand.u32 %s123, 1
        %s304 = smul.addr %s303, 128
        %s305 = scalar_lea.vmem [#allocation8], %s304
        // Predicated region
        $region49: #{tpu_custom_call.1} parent=39 // pred_check
          %p306 = pneg %p136
        $region50: #{tpu_custom_call.1} parent=39 // pred_check_branch
          %308 = sbr.rel (%p306) target = $region52
        $region51: #{tpu_custom_call.1} parent=39 // pred_region
          %309 = dma.done %s302, 2048
        $region52: #{tpu_custom_call.1} parent=39 // pred_fallthru
          _
        %s310 = sand.u32 %s45, 1
        %s311 = scalar_lea.sflag [#allocation4], %s310
        %s312 = sand.u32 %s45, 1
        %s313 = smul.addr %s312, 256
        %s314 = scalar_lea.vmem [#allocation3], %s313
        %p315 = pneg %p58
        %p316 = pneg %p55
        %s317 = sand.u32 %s25, 1
        %s318 = scalar_lea.sflag [#allocation7], %s317
        %s319 = sand.u32 %s71, 1
        %s320 = smul.addr %s319, 128
        %s321 = scalar_lea.vmem [#allocation6], %s320
        %p322 = pneg %p84
        %p323 = pneg %p81
        %s324 = smul.u32 2, %s30
        %p325 = scmp.lt.s32.totalorder %s324, 3
        %s326 = scalar_select %p325, %s324, 3
        %s327 = scalar_lea.vmem %s2, %s326
        %p328 = pneg %p110
        %p329 = pneg %p107
        %s330 = sand.u32 %s25, 1
        %s331 = scalar_lea.sflag [#allocation7], %s330
        %s332 = sand.u32 %s123, 1
        %s333 = smul.addr %s332, 128
        %s334 = scalar_lea.vmem [#allocation8], %s333
        %p335 = pneg %p136
        %p336 = pneg %p133
        %p337 = pneg %p157
        %p338 = pneg %p154
        %p339 = pneg %p183
        %p340 = pneg %p180
        %s341 = sand.u32 %s170, 1
        %s342 = scalar_lea.sflag [#allocation5], %s341
        %s343 = sand.u32 %s170, 1
        %s344 = smul.addr %s343, 256
        %s345 = scalar_lea.vmem [#allocation9], %s344
        %s346 = smul.u32 32, %s29
        %s347 = smul.u32 2, %s30
        %s348 = smul.u32 2, %s30
        %p349 = scmp.lt.s32.totalorder %s348, 3
        %s350 = scalar_select %p349, %s348, 3
        %s351 = scalar_lea.vmem %s2, %s350
        %s352 = smul.u32 2, %s30
        %s353 = smul.u32 32, %s30
        %s354 = smul.u32 32, %s29
        %v356 = vld [vmem:[%s287] sm:$0xff]
        %v357 = vld [vmem:[%s287 + $0x8] sm:$0xff]
        %v358 = vld [vmem:[%s287 + $0x10] sm:$0xff]
        %v359 = vld [vmem:[%s287 + $0x18] sm:$0xff]
        %v360 = vld [vmem:[%s287 + $0x20] sm:$0xff]
        %v361 = vld [vmem:[%s287 + $0x28] sm:$0xff]
        %v362 = vld [vmem:[%s287 + $0x30] sm:$0xff]
        %v363 = vld [vmem:[%s287 + $0x38] sm:$0xff]
        %v364 = vld [vmem:[%s287 + $0x40] sm:$0xff]
        %v365 = vld [vmem:[%s287 + $0x48] sm:$0xff]
        %v366 = vld [vmem:[%s287 + $0x50] sm:$0xff]
        %v367 = vld [vmem:[%s287 + $0x58] sm:$0xff]
        %v368 = vld [vmem:[%s287 + $0x60] sm:$0xff]
        %v369 = vld [vmem:[%s287 + $0x68] sm:$0xff]
        %v370 = vld [vmem:[%s287 + $0x70] sm:$0xff]
        %v371 = vld [vmem:[%s287 + $0x78] sm:$0xff]
        %v372 = vld [vmem:[%s287 + $0x80] sm:$0xff]
        %v373 = vld [vmem:[%s287 + $0x88] sm:$0xff]
        %v374 = vld [vmem:[%s287 + $0x90] sm:$0xff]
        %v375 = vld [vmem:[%s287 + $0x98] sm:$0xff]
        %v376 = vld [vmem:[%s287 + $0xa0] sm:$0xff]
        %v377 = vld [vmem:[%s287 + $0xa8] sm:$0xff]
        %v378 = vld [vmem:[%s287 + $0xb0] sm:$0xff]
        %v379 = vld [vmem:[%s287 + $0xb8] sm:$0xff]
        %v380 = vld [vmem:[%s287 + $0xc0] sm:$0xff]
        %v381 = vld [vmem:[%s287 + $0xc8] sm:$0xff]
        %v382 = vld [vmem:[%s287 + $0xd0] sm:$0xff]
        %v383 = vld [vmem:[%s287 + $0xd8] sm:$0xff]
        %v384 = vld [vmem:[%s287 + $0xe0] sm:$0xff]
        %v385 = vld [vmem:[%s287 + $0xe8] sm:$0xff]
        %v386 = vld [vmem:[%s287 + $0xf0] sm:$0xff]
        %v387 = vld [vmem:[%s287 + $0xf8] sm:$0xff]
        %v388 = vpack.c.bf16 %v357, %v356
        %v389 = vpack.c.bf16 %v359, %v358
        %v390 = vpack.c.bf16 %v361, %v360
        %v391 = vpack.c.bf16 %v363, %v362
        %v392 = vpack.c.bf16 %v365, %v364
        %v393 = vpack.c.bf16 %v367, %v366
        %v394 = vpack.c.bf16 %v369, %v368
        %v395 = vpack.c.bf16 %v371, %v370
        %v396 = vpack.c.bf16 %v373, %v372
        %v397 = vpack.c.bf16 %v375, %v374
        %v398 = vpack.c.bf16 %v377, %v376
        %v399 = vpack.c.bf16 %v379, %v378
        %v400 = vpack.c.bf16 %v381, %v380
        %v401 = vpack.c.bf16 %v383, %v382
        %v402 = vpack.c.bf16 %v385, %v384
        %v403 = vpack.c.bf16 %v387, %v386
        %v404 = vld [vmem:[%s296] sm:$0xff]
        %v405 = vld [vmem:[%s296 + $0x8] sm:$0xff]
        %v406 = vld [vmem:[%s296 + $0x10] sm:$0xff]
        %v407 = vld [vmem:[%s296 + $0x18] sm:$0xff]
        %v408 = vld [vmem:[%s296 + $0x20] sm:$0xff]
        %v409 = vld [vmem:[%s296 + $0x28] sm:$0xff]
        %v410 = vld [vmem:[%s296 + $0x30] sm:$0xff]
        %v411 = vld [vmem:[%s296 + $0x38] sm:$0xff]
        %v412 = vld [vmem:[%s296 + $0x40] sm:$0xff]
        %v413 = vld [vmem:[%s296 + $0x48] sm:$0xff]
        %v414 = vld [vmem:[%s296 + $0x50] sm:$0xff]
        %v415 = vld [vmem:[%s296 + $0x58] sm:$0xff]
        %v416 = vld [vmem:[%s296 + $0x60] sm:$0xff]
        %v417 = vld [vmem:[%s296 + $0x68] sm:$0xff]
        %v418 = vld [vmem:[%s296 + $0x70] sm:$0xff]
        %v419 = vld [vmem:[%s296 + $0x78] sm:$0xff]
        %v420 = vld [vmem:[%s351] sm:$0x3]
        %v422 = vlaneseq
        %v423 = vshrl.u32 %v422, 7
        %v424 = vsub.s32 0, %v423
        %v425 = vrot.slane %v420, %v424
        %v426 = vlaneseq
        %v427 = vshrl.u32 %v426, 7
        %v428 = vsub.s32 1, %v427
        %v429 = vrot.slane %v420, %v428
        %v448 = vunpack.c.l.b16 %v404
        %v449 = vunpack.c.h.b16 %v404
        %v450 = vunpack.c.l.b16 %v405
        %v451 = vunpack.c.h.b16 %v405
        %v452 = vunpack.c.l.b16 %v406
        %v453 = vunpack.c.h.b16 %v406
        %v454 = vunpack.c.l.b16 %v407
        %v455 = vunpack.c.h.b16 %v407
        %v456 = vunpack.c.l.b16 %v408
        %v457 = vunpack.c.h.b16 %v408
        %v458 = vunpack.c.l.b16 %v409
        %v459 = vunpack.c.h.b16 %v409
        %v460 = vunpack.c.l.b16 %v410
        %v461 = vunpack.c.h.b16 %v410
        %v462 = vunpack.c.l.b16 %v411
        %v463 = vunpack.c.h.b16 %v411
        %v464 = vunpack.c.l.b16 %v412
        %v465 = vunpack.c.h.b16 %v412
        %v466 = vunpack.c.l.b16 %v413
        %v467 = vunpack.c.h.b16 %v413
        %v468 = vunpack.c.l.b16 %v414
        %v469 = vunpack.c.h.b16 %v414
        %v470 = vunpack.c.l.b16 %v415
        %v471 = vunpack.c.h.b16 %v415
        %v472 = vunpack.c.l.b16 %v416
        %v473 = vunpack.c.h.b16 %v416
        %v474 = vunpack.c.l.b16 %v417
        %v475 = vunpack.c.h.b16 %v417
        %v476 = vunpack.c.l.b16 %v418
        %v477 = vunpack.c.h.b16 %v418
        %v478 = vunpack.c.l.b16 %v419
        %v479 = vunpack.c.h.b16 %v419
        %v480 = vpack.c.b16 %v450, %v448
        %v481 = vpack.c.b16 %v451, %v449
        %v482 = vpack.c.b16 %v454, %v452
        %v483 = vpack.c.b16 %v455, %v453
        %v484 = vpack.c.b16 %v458, %v456
        %v485 = vpack.c.b16 %v459, %v457
        %v486 = vpack.c.b16 %v462, %v460
        %v487 = vpack.c.b16 %v463, %v461
        %v488 = vpack.c.b16 %v466, %v464
        %v489 = vpack.c.b16 %v467, %v465
        %v490 = vpack.c.b16 %v470, %v468
        %v491 = vpack.c.b16 %v471, %v469
        %v492 = vpack.c.b16 %v474, %v472
        %v493 = vpack.c.b16 %v475, %v473
        %v494 = vpack.c.b16 %v478, %v476
        %v495 = vpack.c.b16 %v479, %v477
        %512 = vmatprep.subr.bf16.mxu0 %v481
        %513 = vmatpush1.bf16.msra.mxu0 %v480
        %514 = vmatprep.subr.bf16.mxu0 %v483
        %515 = vmatpush1.bf16.msra.mxu0 %v482
        %516 = vmatprep.subr.bf16.mxu0 %v485
        %517 = vmatpush1.bf16.msra.mxu0 %v484
        %518 = vmatprep.subr.bf16.mxu0 %v487
        %519 = vmatpush1.bf16.msra.mxu0 %v486
        %520 = vmatprep.subr.bf16.mxu0 %v489
        %521 = vmatpush1.bf16.msra.mxu0 %v488
        %522 = vmatprep.subr.bf16.mxu0 %v491
        %523 = vmatpush1.bf16.msra.mxu0 %v490
        %524 = vmatprep.subr.bf16.mxu0 %v493
        %525 = vmatpush1.bf16.msra.mxu0 %v492
        %526 = vmatprep.subr.bf16.mxu0 %v495
        %527 = vmatpush1.bf16.msra.mxu0 %v494
        %528 = vmatprep.subr.bf16.mxu0 0
        %529 = vmatpush1.bf16.msra.mxu0 0
        %530 = vmatprep.subr.bf16.mxu0 0
        %531 = vmatpush1.bf16.msra.mxu0 0
        %532 = vmatprep.subr.bf16.mxu0 0
        %533 = vmatpush1.bf16.msra.mxu0 0
        %534 = vmatprep.subr.bf16.mxu0 0
        %535 = vmatpush1.bf16.msra.mxu0 0
        %536 = vmatprep.subr.bf16.mxu0 0
        %537 = vmatpush1.bf16.msra.mxu0 0
        %538 = vmatprep.subr.bf16.mxu0 0
        %539 = vmatpush1.bf16.msra.mxu0 0
        %540 = vmatprep.subr.bf16.mxu0 0
        %541 = vmatpush1.bf16.msra.mxu0 0
        %542 = vmatprep.subr.bf16.mxu0 0
        %543 = vmatpush1.bf16.msra.mxu0 0
        %544 = vmatprep.mubr.bf16.mxu0 0
        %545 = vmatmul.mubr.bf16.gmra.mrb[0].mxu0 %v388
        %v546 = vpop.f32.mrb[0].mxu0
        %v547 = vadd.f32 %v425, %v546
        %v548 = vpop.f32.mrb[0].mxu0
        %v549 = vadd.f32 %v429, %v548
        %v550 = vpop.f32.mrb[0].mxu0
        %v551 = vadd.f32 %v425, %v550
        %v552 = vpop.f32.mrb[0].mxu0
        %v553 = vadd.f32 %v429, %v552
        %554 = vmatprep.mubr.bf16.mxu0 0
        %555 = vmatmul.mubr.bf16.gmra.mrb[0].mxu0 %v389
        %v556 = vpop.f32.mrb[0].mxu0
        %v557 = vadd.f32 %v425, %v556
        %v558 = vpop.f32.mrb[0].mxu0
        %v559 = vadd.f32 %v429, %v558
        %v560 = vpop.f32.mrb[0].mxu0
        %v561 = vadd.f32 %v425, %v560
        %v562 = vpop.f32.mrb[0].mxu0
        %v563 = vadd.f32 %v429, %v562
        %564 = vmatprep.mubr.bf16.mxu0 0
        %565 = vmatmul.mubr.bf16.gmra.mrb[0].mxu0 %v390
        %v566 = vpop.f32.mrb[0].mxu0
        %v567 = vadd.f32 %v425, %v566
        %v568 = vpop.f32.mrb[0].mxu0
        %v569 = vadd.f32 %v429, %v568
        %v570 = vpop.f32.mrb[0].mxu0
        %v571 = vadd.f32 %v425, %v570
        %v572 = vpop.f32.mrb[0].mxu0
        %v573 = vadd.f32 %v429, %v572
        %574 = vmatprep.mubr.bf16.mxu0 0
        %575 = vmatmul.mubr.bf16.gmra.mrb[0].mxu0 %v391
        %v576 = vpop.f32.mrb[0].mxu0
        %v577 = vadd.f32 %v425, %v576
        %v578 = vpop.f32.mrb[0].mxu0
        %v579 = vadd.f32 %v429, %v578
        %v580 = vpop.f32.mrb[0].mxu0
        %v581 = vadd.f32 %v425, %v580
        %v582 = vpop.f32.mrb[0].mxu0
        %v583 = vadd.f32 %v429, %v582
        %584 = vmatprep.mubr.bf16.mxu0 0
        %585 = vmatmul.mubr.bf16.gmra.mrb[0].mxu0 %v392
        %v586 = vpop.f32.mrb[0].mxu0
        %v587 = vadd.f32 %v425, %v586
        %v588 = vpop.f32.mrb[0].mxu0
        %v589 = vadd.f32 %v429, %v588
        %v590 = vpop.f32.mrb[0].mxu0
        %v591 = vadd.f32 %v425, %v590
        %v592 = vpop.f32.mrb[0].mxu0
        %v593 = vadd.f32 %v429, %v592
        %594 = vmatprep.mubr.bf16.mxu0 0
        %595 = vmatmul.mubr.bf16.gmra.mrb[0].mxu0 %v393
        %v596 = vpop.f32.mrb[0].mxu0
        %v597 = vadd.f32 %v425, %v596
        %v598 = vpop.f32.mrb[0].mxu0
        %v599 = vadd.f32 %v429, %v598
        %v600 = vpop.f32.mrb[0].mxu0
        %v601 = vadd.f32 %v425, %v600
        %v602 = vpop.f32.mrb[0].mxu0
        %v603 = vadd.f32 %v429, %v602
        %604 = vmatprep.mubr.bf16.mxu0 0
        %605 = vmatmul.mubr.bf16.gmra.mrb[0].mxu0 %v394
        %v606 = vpop.f32.mrb[0].mxu0
        %v607 = vadd.f32 %v425, %v606
        %v608 = vpop.f32.mrb[0].mxu0
        %v609 = vadd.f32 %v429, %v608
        %v610 = vpop.f32.mrb[0].mxu0
        %v611 = vadd.f32 %v425, %v610
        %v612 = vpop.f32.mrb[0].mxu0
        %v613 = vadd.f32 %v429, %v612
        %614 = vmatprep.mubr.bf16.mxu0 0
        %615 = vmatmul.mubr.bf16.gmra.mrb[0].mxu0 %v395
        %v616 = vpop.f32.mrb[0].mxu0
        %v617 = vadd.f32 %v425, %v616
        %v618 = vpop.f32.mrb[0].mxu0
        %v619 = vadd.f32 %v429, %v618
        %v620 = vpop.f32.mrb[0].mxu0
        %v621 = vadd.f32 %v425, %v620
        %v622 = vpop.f32.mrb[0].mxu0
        %v623 = vadd.f32 %v429, %v622
        %624 = vmatprep.mubr.bf16.mxu0 0
        %625 = vmatmul.mubr.bf16.gmra.mrb[0].mxu0 %v396
        %v626 = vpop.f32.mrb[0].mxu0
        %v627 = vadd.f32 %v425, %v626
        %v628 = vpop.f32.mrb[0].mxu0
        %v629 = vadd.f32 %v429, %v628
        %v630 = vpop.f32.mrb[0].mxu0
        %v631 = vadd.f32 %v425, %v630
        %v632 = vpop.f32.mrb[0].mxu0
        %v633 = vadd.f32 %v429, %v632
        %634 = vmatprep.mubr.bf16.mxu0 0
        %635 = vmatmul.mubr.bf16.gmra.mrb[0].mxu0 %v397
        %v636 = vpop.f32.mrb[0].mxu0
        %v637 = vadd.f32 %v425, %v636
        %v638 = vpop.f32.mrb[0].mxu0
        %v639 = vadd.f32 %v429, %v638
        %v640 = vpop.f32.mrb[0].mxu0
        %v641 = vadd.f32 %v425, %v640
        %v642 = vpop.f32.mrb[0].mxu0
        %v643 = vadd.f32 %v429, %v642
        %644 = vmatprep.mubr.bf16.mxu0 0
        %645 = vmatmul.mubr.bf16.gmra.mrb[0].mxu0 %v398
        %v646 = vpop.f32.mrb[0].mxu0
        %v647 = vadd.f32 %v425, %v646
        %v648 = vpop.f32.mrb[0].mxu0
        %v649 = vadd.f32 %v429, %v648
        %v650 = vpop.f32.mrb[0].mxu0
        %v651 = vadd.f32 %v425, %v650
        %v652 = vpop.f32.mrb[0].mxu0
        %v653 = vadd.f32 %v429, %v652
        %654 = vmatprep.mubr.bf16.mxu0 0
        %655 = vmatmul.mubr.bf16.gmra.mrb[0].mxu0 %v399
        %v656 = vpop.f32.mrb[0].mxu0
        %v657 = vadd.f32 %v425, %v656
        %v658 = vpop.f32.mrb[0].mxu0
        %v659 = vadd.f32 %v429, %v658
        %v660 = vpop.f32.mrb[0].mxu0
        %v661 = vadd.f32 %v425, %v660
        %v662 = vpop.f32.mrb[0].mxu0
        %v663 = vadd.f32 %v429, %v662
        %664 = vmatprep.mubr.bf16.mxu0 0
        %665 = vmatmul.mubr.bf16.gmra.mrb[0].mxu0 %v400
        %v666 = vpop.f32.mrb[0].mxu0
        %v667 = vadd.f32 %v425, %v666
        %v668 = vpop.f32.mrb[0].mxu0
        %v669 = vadd.f32 %v429, %v668
        %v670 = vpop.f32.mrb[0].mxu0
        %v671 = vadd.f32 %v425, %v670
        %v672 = vpop.f32.mrb[0].mxu0
        %v673 = vadd.f32 %v429, %v672
        %674 = vmatprep.mubr.bf16.mxu0 0
        %675 = vmatmul.mubr.bf16.gmra.mrb[0].mxu0 %v401
        %v676 = vpop.f32.mrb[0].mxu0
        %v677 = vadd.f32 %v425, %v676
        %v678 = vpop.f32.mrb[0].mxu0
        %v679 = vadd.f32 %v429, %v678
        %v680 = vpop.f32.mrb[0].mxu0
        %v681 = vadd.f32 %v425, %v680
        %v682 = vpop.f32.mrb[0].mxu0
        %v683 = vadd.f32 %v429, %v682
        %684 = vmatprep.mubr.bf16.mxu0 0
        %685 = vmatmul.mubr.bf16.gmra.mrb[0].mxu0 %v402
        %v686 = vpop.f32.mrb[0].mxu0
        %v687 = vadd.f32 %v425, %v686
        %v688 = vpop.f32.mrb[0].mxu0
        %v689 = vadd.f32 %v429, %v688
        %v690 = vpop.f32.mrb[0].mxu0
        %v691 = vadd.f32 %v425, %v690
        %v692 = vpop.f32.mrb[0].mxu0
        %v693 = vadd.f32 %v429, %v692
        %694 = vmatprep.mubr.bf16.mxu0 0
        %695 = vmatmul.mubr.bf16.gmra.mrb[0].mxu0 %v403
        %v696 = vpop.f32.mrb[0].mxu0
        %v697 = vadd.f32 %v425, %v696
        %v698 = vpop.f32.mrb[0].mxu0
        %v699 = vadd.f32 %v429, %v698
        %v700 = vpop.f32.mrb[0].mxu0
        %v701 = vadd.f32 %v425, %v700
        %v702 = vpop.f32.mrb[0].mxu0
        %v703 = vadd.f32 %v429, %v702
        %704 = vdwg.mxu0
        %v705 = vmul.f32 %v547, 0.5
        %v706 = vmul.f32 %v549, 0.5
        %v707 = vmul.f32 %v551, 0.5
        %v708 = vmul.f32 %v553, 0.5
        %v709 = vmul.f32 %v557, 0.5
        %v710 = vmul.f32 %v559, 0.5
        %v711 = vmul.f32 %v561, 0.5
        %v712 = vmul.f32 %v563, 0.5
        %v713 = vmul.f32 %v567, 0.5
        %v714 = vmul.f32 %v569, 0.5
        %v715 = vmul.f32 %v571, 0.5
        %v716 = vmul.f32 %v573, 0.5
        %v717 = vmul.f32 %v577, 0.5
        %v718 = vmul.f32 %v579, 0.5
        %v719 = vmul.f32 %v581, 0.5
        %v720 = vmul.f32 %v583, 0.5
        %v721 = vmul.f32 %v587, 0.5
        %v722 = vmul.f32 %v589, 0.5
        %v723 = vmul.f32 %v591, 0.5
        %v724 = vmul.f32 %v593, 0.5
        %v725 = vmul.f32 %v597, 0.5
        %v726 = vmul.f32 %v599, 0.5
        %v727 = vmul.f32 %v601, 0.5
        %v728 = vmul.f32 %v603, 0.5
        %v729 = vmul.f32 %v607, 0.5
        %v730 = vmul.f32 %v609, 0.5
        %v731 = vmul.f32 %v611, 0.5
        %v732 = vmul.f32 %v613, 0.5
        %v733 = vmul.f32 %v617, 0.5
        %v734 = vmul.f32 %v619, 0.5
        %v735 = vmul.f32 %v621, 0.5
        %v736 = vmul.f32 %v623, 0.5
        %v737 = vmul.f32 %v627, 0.5
        %v738 = vmul.f32 %v629, 0.5
        %v739 = vmul.f32 %v631, 0.5
        %v740 = vmul.f32 %v633, 0.5
        %v741 = vmul.f32 %v637, 0.5
        %v742 = vmul.f32 %v639, 0.5
        %v743 = vmul.f32 %v641, 0.5
        %v744 = vmul.f32 %v643, 0.5
        %v745 = vmul.f32 %v647, 0.5
        %v746 = vmul.f32 %v649, 0.5
        %v747 = vmul.f32 %v651, 0.5
        %v748 = vmul.f32 %v653, 0.5
        %v749 = vmul.f32 %v657, 0.5
        %v750 = vmul.f32 %v659, 0.5
        %v751 = vmul.f32 %v661, 0.5
        %v752 = vmul.f32 %v663, 0.5
        %v753 = vmul.f32 %v667, 0.5
        %v754 = vmul.f32 %v669, 0.5
        %v755 = vmul.f32 %v671, 0.5
        %v756 = vmul.f32 %v673, 0.5
        %v757 = vmul.f32 %v677, 0.5
        %v758 = vmul.f32 %v679, 0.5
        %v759 = vmul.f32 %v681, 0.5
        %v760 = vmul.f32 %v683, 0.5
        %v761 = vmul.f32 %v687, 0.5
        %v762 = vmul.f32 %v689, 0.5
        %v763 = vmul.f32 %v691, 0.5
        %v764 = vmul.f32 %v693, 0.5
        %v765 = vmul.f32 %v697, 0.5
        %v766 = vmul.f32 %v699, 0.5
        %v767 = vmul.f32 %v701, 0.5
        %v768 = vmul.f32 %v703, 0.5
        %v769 = vmul.f32 %v547, 0.70710677
        %v770 = vmul.f32 %v549, 0.70710677
        %v771 = vmul.f32 %v551, 0.70710677
        %v772 = vmul.f32 %v553, 0.70710677
        %v773 = vmul.f32 %v557, 0.70710677
        %v774 = vmul.f32 %v559, 0.70710677
        %v775 = vmul.f32 %v561, 0.70710677
        %v776 = vmul.f32 %v563, 0.70710677
        %v777 = vmul.f32 %v567, 0.70710677
        %v778 = vmul.f32 %v569, 0.70710677
        %v779 = vmul.f32 %v571, 0.70710677
        %v780 = vmul.f32 %v573, 0.70710677
        %v781 = vmul.f32 %v577, 0.70710677
        %v782 = vmul.f32 %v579, 0.70710677
        %v783 = vmul.f32 %v581, 0.70710677
        %v784 = vmul.f32 %v583, 0.70710677
        %v785 = vmul.f32 %v587, 0.70710677
        %v786 = vmul.f32 %v589, 0.70710677
        %v787 = vmul.f32 %v591, 0.70710677
        %v788 = vmul.f32 %v593, 0.70710677
        %v789 = vmul.f32 %v597, 0.70710677
        %v790 = vmul.f32 %v599, 0.70710677
        %v791 = vmul.f32 %v601, 0.70710677
        %v792 = vmul.f32 %v603, 0.70710677
        %v793 = vmul.f32 %v607, 0.70710677
        %v794 = vmul.f32 %v609, 0.70710677
        %v795 = vmul.f32 %v611, 0.70710677
        %v796 = vmul.f32 %v613, 0.70710677
        %v797 = vmul.f32 %v617, 0.70710677
        %v798 = vmul.f32 %v619, 0.70710677
        %v799 = vmul.f32 %v621, 0.70710677
        %v800 = vmul.f32 %v623, 0.70710677
        %v801 = vmul.f32 %v627, 0.70710677
        %v802 = vmul.f32 %v629, 0.70710677
        %v803 = vmul.f32 %v631, 0.70710677
        %v804 = vmul.f32 %v633, 0.70710677
        %v805 = vmul.f32 %v637, 0.70710677
        %v806 = vmul.f32 %v639, 0.70710677
        %v807 = vmul.f32 %v641, 0.70710677
        %v808 = vmul.f32 %v643, 0.70710677
        %v809 = vmul.f32 %v647, 0.70710677
        %v810 = vmul.f32 %v649, 0.70710677
        %v811 = vmul.f32 %v651, 0.70710677
        %v812 = vmul.f32 %v653, 0.70710677
        %v813 = vmul.f32 %v657, 0.70710677
        %v814 = vmul.f32 %v659, 0.70710677
        %v815 = vmul.f32 %v661, 0.70710677
        %v816 = vmul.f32 %v663, 0.70710677
        %v817 = vmul.f32 %v667, 0.70710677
        %v818 = vmul.f32 %v669, 0.70710677
        %v819 = vmul.f32 %v671, 0.70710677
        %v820 = vmul.f32 %v673, 0.70710677
        %v821 = vmul.f32 %v677, 0.70710677
        %v822 = vmul.f32 %v679, 0.70710677
        %v823 = vmul.f32 %v681, 0.70710677
        %v824 = vmul.f32 %v683, 0.70710677
        %v825 = vmul.f32 %v687, 0.70710677
        %v826 = vmul.f32 %v689, 0.70710677
        %v827 = vmul.f32 %v691, 0.70710677
        %v828 = vmul.f32 %v693, 0.70710677
        %v829 = vmul.f32 %v697, 0.70710677
        %v830 = vmul.f32 %v699, 0.70710677
        %v831 = vmul.f32 %v701, 0.70710677
        %v832 = vmul.f32 %v703, 0.70710677
        %vm833 = vcmp.ge.f32.partialorder %v769, 0.0
        %vm834 = vcmp.ge.f32.partialorder %v770, 0.0
        %vm835 = vcmp.ge.f32.partialorder %v771, 0.0
        %vm836 = vcmp.ge.f32.partialorder %v772, 0.0
        %vm837 = vcmp.ge.f32.partialorder %v773, 0.0
        %vm838 = vcmp.ge.f32.partialorder %v774, 0.0
        %vm839 = vcmp.ge.f32.partialorder %v775, 0.0
        %vm840 = vcmp.ge.f32.partialorder %v776, 0.0
        %vm841 = vcmp.ge.f32.partialorder %v777, 0.0
        %vm842 = vcmp.ge.f32.partialorder %v778, 0.0
        %vm843 = vcmp.ge.f32.partialorder %v779, 0.0
        %vm844 = vcmp.ge.f32.partialorder %v780, 0.0
        %vm845 = vcmp.ge.f32.partialorder %v781, 0.0
        %vm846 = vcmp.ge.f32.partialorder %v782, 0.0
        %vm847 = vcmp.ge.f32.partialorder %v783, 0.0
        %vm848 = vcmp.ge.f32.partialorder %v784, 0.0
        %vm849 = vcmp.ge.f32.partialorder %v785, 0.0
        %vm850 = vcmp.ge.f32.partialorder %v786, 0.0
        %vm851 = vcmp.ge.f32.partialorder %v787, 0.0
        %vm852 = vcmp.ge.f32.partialorder %v788, 0.0
        %vm853 = vcmp.ge.f32.partialorder %v789, 0.0
        %vm854 = vcmp.ge.f32.partialorder %v790, 0.0
        %vm855 = vcmp.ge.f32.partialorder %v791, 0.0
        %vm856 = vcmp.ge.f32.partialorder %v792, 0.0
        %vm857 = vcmp.ge.f32.partialorder %v793, 0.0
        %vm858 = vcmp.ge.f32.partialorder %v794, 0.0
        %vm859 = vcmp.ge.f32.partialorder %v795, 0.0
        %vm860 = vcmp.ge.f32.partialorder %v796, 0.0
        %vm861 = vcmp.ge.f32.partialorder %v797, 0.0
        %vm862 = vcmp.ge.f32.partialorder %v798, 0.0
        %vm863 = vcmp.ge.f32.partialorder %v799, 0.0
        %vm864 = vcmp.ge.f32.partialorder %v800, 0.0
        %vm865 = vcmp.ge.f32.partialorder %v801, 0.0
        %vm866 = vcmp.ge.f32.partialorder %v802, 0.0
        %vm867 = vcmp.ge.f32.partialorder %v803, 0.0
        %vm868 = vcmp.ge.f32.partialorder %v804, 0.0
        %vm869 = vcmp.ge.f32.partialorder %v805, 0.0
        %vm870 = vcmp.ge.f32.partialorder %v806, 0.0
        %vm871 = vcmp.ge.f32.partialorder %v807, 0.0
        %vm872 = vcmp.ge.f32.partialorder %v808, 0.0
        %vm873 = vcmp.ge.f32.partialorder %v809, 0.0
        %vm874 = vcmp.ge.f32.partialorder %v810, 0.0
        %vm875 = vcmp.ge.f32.partialorder %v811, 0.0
        %vm876 = vcmp.ge.f32.partialorder %v812, 0.0
        %vm877 = vcmp.ge.f32.partialorder %v813, 0.0
        %vm878 = vcmp.ge.f32.partialorder %v814, 0.0
        %vm879 = vcmp.ge.f32.partialorder %v815, 0.0
        %vm880 = vcmp.ge.f32.partialorder %v816, 0.0
        %vm881 = vcmp.ge.f32.partialorder %v817, 0.0
        %vm882 = vcmp.ge.f32.partialorder %v818, 0.0
        %vm883 = vcmp.ge.f32.partialorder %v819, 0.0
        %vm884 = vcmp.ge.f32.partialorder %v820, 0.0
        %vm885 = vcmp.ge.f32.partialorder %v821, 0.0
        %vm886 = vcmp.ge.f32.partialorder %v822, 0.0
        %vm887 = vcmp.ge.f32.partialorder %v823, 0.0
        %vm888 = vcmp.ge.f32.partialorder %v824, 0.0
        %vm889 = vcmp.ge.f32.partialorder %v825, 0.0
        %vm890 = vcmp.ge.f32.partialorder %v826, 0.0
        %vm891 = vcmp.ge.f32.partialorder %v827, 0.0
        %vm892 = vcmp.ge.f32.partialorder %v828, 0.0
        %vm893 = vcmp.ge.f32.partialorder %v829, 0.0
        %vm894 = vcmp.ge.f32.partialorder %v830, 0.0
        %vm895 = vcmp.ge.f32.partialorder %v831, 0.0
        %vm896 = vcmp.ge.f32.partialorder %v832, 0.0
        %v897 = vsel %vm833, 1.0, -1.0
        %v898 = vsel %vm834, 1.0, -1.0
        %v899 = vsel %vm835, 1.0, -1.0
        %v900 = vsel %vm836, 1.0, -1.0
        %v901 = vsel %vm837, 1.0, -1.0
        %v902 = vsel %vm838, 1.0, -1.0
        %v903 = vsel %vm839, 1.0, -1.0
        %v904 = vsel %vm840, 1.0, -1.0
        %v905 = vsel %vm841, 1.0, -1.0
        %v906 = vsel %vm842, 1.0, -1.0
        %v907 = vsel %vm843, 1.0, -1.0
        %v908 = vsel %vm844, 1.0, -1.0
        %v909 = vsel %vm845, 1.0, -1.0
        %v910 = vsel %vm846, 1.0, -1.0
        %v911 = vsel %vm847, 1.0, -1.0
        %v912 = vsel %vm848, 1.0, -1.0
        %v913 = vsel %vm849, 1.0, -1.0
        %v914 = vsel %vm850, 1.0, -1.0
        %v915 = vsel %vm851, 1.0, -1.0
        %v916 = vsel %vm852, 1.0, -1.0
        %v917 = vsel %vm853, 1.0, -1.0
        %v918 = vsel %vm854, 1.0, -1.0
        %v919 = vsel %vm855, 1.0, -1.0
        %v920 = vsel %vm856, 1.0, -1.0
        %v921 = vsel %vm857, 1.0, -1.0
        %v922 = vsel %vm858, 1.0, -1.0
        %v923 = vsel %vm859, 1.0, -1.0
        %v924 = vsel %vm860, 1.0, -1.0
        %v925 = vsel %vm861, 1.0, -1.0
        %v926 = vsel %vm862, 1.0, -1.0
        %v927 = vsel %vm863, 1.0, -1.0
        %v928 = vsel %vm864, 1.0, -1.0
        %v929 = vsel %vm865, 1.0, -1.0
        %v930 = vsel %vm866, 1.0, -1.0
        %v931 = vsel %vm867, 1.0, -1.0
        %v932 = vsel %vm868, 1.0, -1.0
        %v933 = vsel %vm869, 1.0, -1.0
        %v934 = vsel %vm870, 1.0, -1.0
        %v935 = vsel %vm871, 1.0, -1.0
        %v936 = vsel %vm872, 1.0, -1.0
        %v937 = vsel %vm873, 1.0, -1.0
        %v938 = vsel %vm874, 1.0, -1.0
        %v939 = vsel %vm875, 1.0, -1.0
        %v940 = vsel %vm876, 1.0, -1.0
        %v941 = vsel %vm877, 1.0, -1.0
        %v942 = vsel %vm878, 1.0, -1.0
        %v943 = vsel %vm879, 1.0, -1.0
        %v944 = vsel %vm880, 1.0, -1.0
        %v945 = vsel %vm881, 1.0, -1.0
        %v946 = vsel %vm882, 1.0, -1.0
        %v947 = vsel %vm883, 1.0, -1.0
        %v948 = vsel %vm884, 1.0, -1.0
        %v949 = vsel %vm885, 1.0, -1.0
        %v950 = vsel %vm886, 1.0, -1.0
        %v951 = vsel %vm887, 1.0, -1.0
        %v952 = vsel %vm888, 1.0, -1.0
        %v953 = vsel %vm889, 1.0, -1.0
        %v954 = vsel %vm890, 1.0, -1.0
        %v955 = vsel %vm891, 1.0, -1.0
        %v956 = vsel %vm892, 1.0, -1.0
        %v957 = vsel %vm893, 1.0, -1.0
        %v958 = vsel %vm894, 1.0, -1.0
        %v959 = vsel %vm895, 1.0, -1.0
        %v960 = vsel %vm896, 1.0, -1.0
        %v961 = vand.u32 2147483647, %v769
        %v962 = vand.u32 2147483647, %v770
        %v963 = vand.u32 2147483647, %v771
        %v964 = vand.u32 2147483647, %v772
        %v965 = vand.u32 2147483647, %v773
        %v966 = vand.u32 2147483647, %v774
        %v967 = vand.u32 2147483647, %v775
        %v968 = vand.u32 2147483647, %v776
        %v969 = vand.u32 2147483647, %v777
        %v970 = vand.u32 2147483647, %v778
        %v971 = vand.u32 2147483647, %v779
        %v972 = vand.u32 2147483647, %v780
        %v973 = vand.u32 2147483647, %v781
        %v974 = vand.u32 2147483647, %v782
        %v975 = vand.u32 2147483647, %v783
        %v976 = vand.u32 2147483647, %v784
        %v977 = vand.u32 2147483647, %v785
        %v978 = vand.u32 2147483647, %v786
        %v979 = vand.u32 2147483647, %v787
        %v980 = vand.u32 2147483647, %v788
        %v981 = vand.u32 2147483647, %v789
        %v982 = vand.u32 2147483647, %v790
        %v983 = vand.u32 2147483647, %v791
        %v984 = vand.u32 2147483647, %v792
        %v985 = vand.u32 2147483647, %v793
        %v986 = vand.u32 2147483647, %v794
        %v987 = vand.u32 2147483647, %v795
        %v988 = vand.u32 2147483647, %v796
        %v989 = vand.u32 2147483647, %v797
        %v990 = vand.u32 2147483647, %v798
        %v991 = vand.u32 2147483647, %v799
        %v992 = vand.u32 2147483647, %v800
        %v993 = vand.u32 2147483647, %v801
        %v994 = vand.u32 2147483647, %v802
        %v995 = vand.u32 2147483647, %v803
        %v996 = vand.u32 2147483647, %v804
        %v997 = vand.u32 2147483647, %v805
        %v998 = vand.u32 2147483647, %v806
        %v999 = vand.u32 2147483647, %v807
        %v1000 = vand.u32 2147483647, %v808
        %v1001 = vand.u32 2147483647, %v809
        %v1002 = vand.u32 2147483647, %v810
        %v1003 = vand.u32 2147483647, %v811
        %v1004 = vand.u32 2147483647, %v812
        %v1005 = vand.u32 2147483647, %v813
        %v1006 = vand.u32 2147483647, %v814
        %v1007 = vand.u32 2147483647, %v815
        %v1008 = vand.u32 2147483647, %v816
        %v1009 = vand.u32 2147483647, %v817
        %v1010 = vand.u32 2147483647, %v818
        %v1011 = vand.u32 2147483647, %v819
        %v1012 = vand.u32 2147483647, %v820
        %v1013 = vand.u32 2147483647, %v821
        %v1014 = vand.u32 2147483647, %v822
        %v1015 = vand.u32 2147483647, %v823
        %v1016 = vand.u32 2147483647, %v824
        %v1017 = vand.u32 2147483647, %v825
        %v1018 = vand.u32 2147483647, %v826
        %v1019 = vand.u32 2147483647, %v827
        %v1020 = vand.u32 2147483647, %v828
        %v1021 = vand.u32 2147483647, %v829
        %v1022 = vand.u32 2147483647, %v830
        %v1023 = vand.u32 2147483647, %v831
        %v1024 = vand.u32 2147483647, %v832
        %v1025 = vmul.f32 %v961, 0.3275911
        %v1026 = vmul.f32 %v962, 0.3275911
        %v1027 = vmul.f32 %v963, 0.3275911
        %v1028 = vmul.f32 %v964, 0.3275911
        %v1029 = vmul.f32 %v965, 0.3275911
        %v1030 = vmul.f32 %v966, 0.3275911
        %v1031 = vmul.f32 %v967, 0.3275911
        %v1032 = vmul.f32 %v968, 0.3275911
        %v1033 = vmul.f32 %v969, 0.3275911
        %v1034 = vmul.f32 %v970, 0.3275911
        %v1035 = vmul.f32 %v971, 0.3275911
        %v1036 = vmul.f32 %v972, 0.3275911
        %v1037 = vmul.f32 %v973, 0.3275911
        %v1038 = vmul.f32 %v974, 0.3275911
        %v1039 = vmul.f32 %v975, 0.3275911
        %v1040 = vmul.f32 %v976, 0.3275911
        %v1041 = vmul.f32 %v977, 0.3275911
        %v1042 = vmul.f32 %v978, 0.3275911
        %v1043 = vmul.f32 %v979, 0.3275911
        %v1044 = vmul.f32 %v980, 0.3275911
        %v1045 = vmul.f32 %v981, 0.3275911
        %v1046 = vmul.f32 %v982, 0.3275911
        %v1047 = vmul.f32 %v983, 0.3275911
        %v1048 = vmul.f32 %v984, 0.3275911
        %v1049 = vmul.f32 %v985, 0.3275911
        %v1050 = vmul.f32 %v986, 0.3275911
        %v1051 = vmul.f32 %v987, 0.3275911
        %v1052 = vmul.f32 %v988, 0.3275911
        %v1053 = vmul.f32 %v989, 0.3275911
        %v1054 = vmul.f32 %v990, 0.3275911
        %v1055 = vmul.f32 %v991, 0.3275911
        %v1056 = vmul.f32 %v992, 0.3275911
        %v1057 = vmul.f32 %v993, 0.3275911
        %v1058 = vmul.f32 %v994, 0.3275911
        %v1059 = vmul.f32 %v995, 0.3275911
        %v1060 = vmul.f32 %v996, 0.3275911
        %v1061 = vmul.f32 %v997, 0.3275911
        %v1062 = vmul.f32 %v998, 0.3275911
        %v1063 = vmul.f32 %v999, 0.3275911
        %v1064 = vmul.f32 %v1000, 0.3275911
        %v1065 = vmul.f32 %v1001, 0.3275911
        %v1066 = vmul.f32 %v1002, 0.3275911
        %v1067 = vmul.f32 %v1003, 0.3275911
        %v1068 = vmul.f32 %v1004, 0.3275911
        %v1069 = vmul.f32 %v1005, 0.3275911
        %v1070 = vmul.f32 %v1006, 0.3275911
        %v1071 = vmul.f32 %v1007, 0.3275911
        %v1072 = vmul.f32 %v1008, 0.3275911
        %v1073 = vmul.f32 %v1009, 0.3275911
        %v1074 = vmul.f32 %v1010, 0.3275911
        %v1075 = vmul.f32 %v1011, 0.3275911
        %v1076 = vmul.f32 %v1012, 0.3275911
        %v1077 = vmul.f32 %v1013, 0.3275911
        %v1078 = vmul.f32 %v1014, 0.3275911
        %v1079 = vmul.f32 %v1015, 0.3275911
        %v1080 = vmul.f32 %v1016, 0.3275911
        %v1081 = vmul.f32 %v1017, 0.3275911
        %v1082 = vmul.f32 %v1018, 0.3275911
        %v1083 = vmul.f32 %v1019, 0.3275911
        %v1084 = vmul.f32 %v1020, 0.3275911
        %v1085 = vmul.f32 %v1021, 0.3275911
        %v1086 = vmul.f32 %v1022, 0.3275911
        %v1087 = vmul.f32 %v1023, 0.3275911
        %v1088 = vmul.f32 %v1024, 0.3275911
        %v1089 = vadd.f32 %v1025, 1.0
        %v1090 = vadd.f32 %v1026, 1.0
        %v1091 = vadd.f32 %v1027, 1.0
        %v1092 = vadd.f32 %v1028, 1.0
        %v1093 = vadd.f32 %v1029, 1.0
        %v1094 = vadd.f32 %v1030, 1.0
        %v1095 = vadd.f32 %v1031, 1.0
        %v1096 = vadd.f32 %v1032, 1.0
        %v1097 = vadd.f32 %v1033, 1.0
        %v1098 = vadd.f32 %v1034, 1.0
        %v1099 = vadd.f32 %v1035, 1.0
        %v1100 = vadd.f32 %v1036, 1.0
        %v1101 = vadd.f32 %v1037, 1.0
        %v1102 = vadd.f32 %v1038, 1.0
        %v1103 = vadd.f32 %v1039, 1.0
        %v1104 = vadd.f32 %v1040, 1.0
        %v1105 = vadd.f32 %v1041, 1.0
        %v1106 = vadd.f32 %v1042, 1.0
        %v1107 = vadd.f32 %v1043, 1.0
        %v1108 = vadd.f32 %v1044, 1.0
        %v1109 = vadd.f32 %v1045, 1.0
        %v1110 = vadd.f32 %v1046, 1.0
        %v1111 = vadd.f32 %v1047, 1.0
        %v1112 = vadd.f32 %v1048, 1.0
        %v1113 = vadd.f32 %v1049, 1.0
        %v1114 = vadd.f32 %v1050, 1.0
        %v1115 = vadd.f32 %v1051, 1.0
        %v1116 = vadd.f32 %v1052, 1.0
        %v1117 = vadd.f32 %v1053, 1.0
        %v1118 = vadd.f32 %v1054, 1.0
        %v1119 = vadd.f32 %v1055, 1.0
        %v1120 = vadd.f32 %v1056, 1.0
        %v1121 = vadd.f32 %v1057, 1.0
        %v1122 = vadd.f32 %v1058, 1.0
        %v1123 = vadd.f32 %v1059, 1.0
        %v1124 = vadd.f32 %v1060, 1.0
        %v1125 = vadd.f32 %v1061, 1.0
        %v1126 = vadd.f32 %v1062, 1.0
        %v1127 = vadd.f32 %v1063, 1.0
        %v1128 = vadd.f32 %v1064, 1.0
        %v1129 = vadd.f32 %v1065, 1.0
        %v1130 = vadd.f32 %v1066, 1.0
        %v1131 = vadd.f32 %v1067, 1.0
        %v1132 = vadd.f32 %v1068, 1.0
        %v1133 = vadd.f32 %v1069, 1.0
        %v1134 = vadd.f32 %v1070, 1.0
        %v1135 = vadd.f32 %v1071, 1.0
        %v1136 = vadd.f32 %v1072, 1.0
        %v1137 = vadd.f32 %v1073, 1.0
        %v1138 = vadd.f32 %v1074, 1.0
        %v1139 = vadd.f32 %v1075, 1.0
        %v1140 = vadd.f32 %v1076, 1.0
        %v1141 = vadd.f32 %v1077, 1.0
        %v1142 = vadd.f32 %v1078, 1.0
        %v1143 = vadd.f32 %v1079, 1.0
        %v1144 = vadd.f32 %v1080, 1.0
        %v1145 = vadd.f32 %v1081, 1.0
        %v1146 = vadd.f32 %v1082, 1.0
        %v1147 = vadd.f32 %v1083, 1.0
        %v1148 = vadd.f32 %v1084, 1.0
        %v1149 = vadd.f32 %v1085, 1.0
        %v1150 = vadd.f32 %v1086, 1.0
        %v1151 = vadd.f32 %v1087, 1.0
        %v1152 = vadd.f32 %v1088, 1.0
        %v1153 = vrcp.pop %v1089
        %v1154 = vmul.f32 1.0, %v1153
        %v1155 = vrcp.pop %v1090
        %v1156 = vmul.f32 1.0, %v1155
        %v1157 = vrcp.pop %v1091
        %v1158 = vmul.f32 1.0, %v1157
        %v1159 = vrcp.pop %v1092
        %v1160 = vmul.f32 1.0, %v1159
        %v1161 = vrcp.pop %v1093
        %v1162 = vmul.f32 1.0, %v1161
        %v1163 = vrcp.pop %v1094
        %v1164 = vmul.f32 1.0, %v1163
        %v1165 = vrcp.pop %v1095
        %v1166 = vmul.f32 1.0, %v1165
        %v1167 = vrcp.pop %v1096
        %v1168 = vmul.f32 1.0, %v1167
        %v1169 = vrcp.pop %v1097
        %v1170 = vmul.f32 1.0, %v1169
        %v1171 = vrcp.pop %v1098
        %v1172 = vmul.f32 1.0, %v1171
        %v1173 = vrcp.pop %v1099
        %v1174 = vmul.f32 1.0, %v1173
        %v1175 = vrcp.pop %v1100
        %v1176 = vmul.f32 1.0, %v1175
        %v1177 = vrcp.pop %v1101
        %v1178 = vmul.f32 1.0, %v1177
        %v1179 = vrcp.pop %v1102
        %v1180 = vmul.f32 1.0, %v1179
        %v1181 = vrcp.pop %v1103
        %v1182 = vmul.f32 1.0, %v1181
        %v1183 = vrcp.pop %v1104
        %v1184 = vmul.f32 1.0, %v1183
        %v1185 = vrcp.pop %v1105
        %v1186 = vmul.f32 1.0, %v1185
        %v1187 = vrcp.pop %v1106
        %v1188 = vmul.f32 1.0, %v1187
        %v1189 = vrcp.pop %v1107
        %v1190 = vmul.f32 1.0, %v1189
        %v1191 = vrcp.pop %v1108
        %v1192 = vmul.f32 1.0, %v1191
        %v1193 = vrcp.pop %v1109
        %v1194 = vmul.f32 1.0, %v1193
        %v1195 = vrcp.pop %v1110
        %v1196 = vmul.f32 1.0, %v1195
        %v1197 = vrcp.pop %v1111
        %v1198 = vmul.f32 1.0, %v1197
        %v1199 = vrcp.pop %v1112
        %v1200 = vmul.f32 1.0, %v1199
        %v1201 = vrcp.pop %v1113
        %v1202 = vmul.f32 1.0, %v1201
        %v1203 = vrcp.pop %v1114
        %v1204 = vmul.f32 1.0, %v1203
        %v1205 = vrcp.pop %v1115
        %v1206 = vmul.f32 1.0, %v1205
        %v1207 = vrcp.pop %v1116
        %v1208 = vmul.f32 1.0, %v1207
        %v1209 = vrcp.pop %v1117
        %v1210 = vmul.f32 1.0, %v1209
        %v1211 = vrcp.pop %v1118
        %v1212 = vmul.f32 1.0, %v1211
        %v1213 = vrcp.pop %v1119
        %v1214 = vmul.f32 1.0, %v1213
        %v1215 = vrcp.pop %v1120
        %v1216 = vmul.f32 1.0, %v1215
        %v1217 = vrcp.pop %v1121
        %v1218 = vmul.f32 1.0, %v1217
        %v1219 = vrcp.pop %v1122
        %v1220 = vmul.f32 1.0, %v1219
        %v1221 = vrcp.pop %v1123
        %v1222 = vmul.f32 1.0, %v1221
        %v1223 = vrcp.pop %v1124
        %v1224 = vmul.f32 1.0, %v1223
        %v1225 = vrcp.pop %v1125
        %v1226 = vmul.f32 1.0, %v1225
        %v1227 = vrcp.pop %v1126
        %v1228 = vmul.f32 1.0, %v1227
        %v1229 = vrcp.pop %v1127
        %v1230 = vmul.f32 1.0, %v1229
        %v1231 = vrcp.pop %v1128
        %v1232 = vmul.f32 1.0, %v1231
        %v1233 = vrcp.pop %v1129
        %v1234 = vmul.f32 1.0, %v1233
        %v1235 = vrcp.pop %v1130
        %v1236 = vmul.f32 1.0, %v1235
        %v1237 = vrcp.pop %v1131
        %v1238 = vmul.f32 1.0, %v1237
        %v1239 = vrcp.pop %v1132
        %v1240 = vmul.f32 1.0, %v1239
        %v1241 = vrcp.pop %v1133
        %v1242 = vmul.f32 1.0, %v1241
        %v1243 = vrcp.pop %v1134
        %v1244 = vmul.f32 1.0, %v1243
        %v1245 = vrcp.pop %v1135
        %v1246 = vmul.f32 1.0, %v1245
        %v1247 = vrcp.pop %v1136
        %v1248 = vmul.f32 1.0, %v1247
        %v1249 = vrcp.pop %v1137
        %v1250 = vmul.f32 1.0, %v1249
        %v1251 = vrcp.pop %v1138
        %v1252 = vmul.f32 1.0, %v1251
        %v1253 = vrcp.pop %v1139
        %v1254 = vmul.f32 1.0, %v1253
        %v1255 = vrcp.pop %v1140
        %v1256 = vmul.f32 1.0, %v1255
        %v1257 = vrcp.pop %v1141
        %v1258 = vmul.f32 1.0, %v1257
        %v1259 = vrcp.pop %v1142
        %v1260 = vmul.f32 1.0, %v1259
        %v1261 = vrcp.pop %v1143
        %v1262 = vmul.f32 1.0, %v1261
        %v1263 = vrcp.pop %v1144
        %v1264 = vmul.f32 1.0, %v1263
        %v1265 = vrcp.pop %v1145
        %v1266 = vmul.f32 1.0, %v1265
        %v1267 = vrcp.pop %v1146
        %v1268 = vmul.f32 1.0, %v1267
        %v1269 = vrcp.pop %v1147
        %v1270 = vmul.f32 1.0, %v1269
        %v1271 = vrcp.pop %v1148
        %v1272 = vmul.f32 1.0, %v1271
        %v1273 = vrcp.pop %v1149
        %v1274 = vmul.f32 1.0, %v1273
        %v1275 = vrcp.pop %v1150
        %v1276 = vmul.f32 1.0, %v1275
        %v1277 = vrcp.pop %v1151
        %v1278 = vmul.f32 1.0, %v1277
        %v1279 = vrcp.pop %v1152
        %v1280 = vmul.f32 1.0, %v1279
        %v1281 = vmul.f32 %v1154, 1.0614054
        %v1282 = vmul.f32 %v1156, 1.0614054
        %v1283 = vmul.f32 %v1158, 1.0614054
        %v1284 = vmul.f32 %v1160, 1.0614054
        %v1285 = vmul.f32 %v1162, 1.0614054
        %v1286 = vmul.f32 %v1164, 1.0614054
        %v1287 = vmul.f32 %v1166, 1.0614054
        %v1288 = vmul.f32 %v1168, 1.0614054
        %v1289 = vmul.f32 %v1170, 1.0614054
        %v1290 = vmul.f32 %v1172, 1.0614054
        %v1291 = vmul.f32 %v1174, 1.0614054
        %v1292 = vmul.f32 %v1176, 1.0614054
        %v1293 = vmul.f32 %v1178, 1.0614054
        %v1294 = vmul.f32 %v1180, 1.0614054
        %v1295 = vmul.f32 %v1182, 1.0614054
        %v1296 = vmul.f32 %v1184, 1.0614054
        %v1297 = vmul.f32 %v1186, 1.0614054
        %v1298 = vmul.f32 %v1188, 1.0614054
        %v1299 = vmul.f32 %v1190, 1.0614054
        %v1300 = vmul.f32 %v1192, 1.0614054
        %v1301 = vmul.f32 %v1194, 1.0614054
        %v1302 = vmul.f32 %v1196, 1.0614054
        %v1303 = vmul.f32 %v1198, 1.0614054
        %v1304 = vmul.f32 %v1200, 1.0614054
        %v1305 = vmul.f32 %v1202, 1.0614054
        %v1306 = vmul.f32 %v1204, 1.0614054
        %v1307 = vmul.f32 %v1206, 1.0614054
        %v1308 = vmul.f32 %v1208, 1.0614054
        %v1309 = vmul.f32 %v1210, 1.0614054
        %v1310 = vmul.f32 %v1212, 1.0614054
        %v1311 = vmul.f32 %v1214, 1.0614054
        %v1312 = vmul.f32 %v1216, 1.0614054
        %v1313 = vmul.f32 %v1218, 1.0614054
        %v1314 = vmul.f32 %v1220, 1.0614054
        %v1315 = vmul.f32 %v1222, 1.0614054
        %v1316 = vmul.f32 %v1224, 1.0614054
        %v1317 = vmul.f32 %v1226, 1.0614054
        %v1318 = vmul.f32 %v1228, 1.0614054
        %v1319 = vmul.f32 %v1230, 1.0614054
        %v1320 = vmul.f32 %v1232, 1.0614054
        %v1321 = vmul.f32 %v1234, 1.0614054
        %v1322 = vmul.f32 %v1236, 1.0614054
        %v1323 = vmul.f32 %v1238, 1.0614054
        %v1324 = vmul.f32 %v1240, 1.0614054
        %v1325 = vmul.f32 %v1242, 1.0614054
        %v1326 = vmul.f32 %v1244, 1.0614054
        %v1327 = vmul.f32 %v1246, 1.0614054
        %v1328 = vmul.f32 %v1248, 1.0614054
        %v1329 = vmul.f32 %v1250, 1.0614054
        %v1330 = vmul.f32 %v1252, 1.0614054
        %v1331 = vmul.f32 %v1254, 1.0614054
        %v1332 = vmul.f32 %v1256, 1.0614054
        %v1333 = vmul.f32 %v1258, 1.0614054
        %v1334 = vmul.f32 %v1260, 1.0614054
        %v1335 = vmul.f32 %v1262, 1.0614054
        %v1336 = vmul.f32 %v1264, 1.0614054
        %v1337 = vmul.f32 %v1266, 1.0614054
        %v1338 = vmul.f32 %v1268, 1.0614054
        %v1339 = vmul.f32 %v1270, 1.0614054
        %v1340 = vmul.f32 %v1272, 1.0614054
        %v1341 = vmul.f32 %v1274, 1.0614054
        %v1342 = vmul.f32 %v1276, 1.0614054
        %v1343 = vmul.f32 %v1278, 1.0614054
        %v1344 = vmul.f32 %v1280, 1.0614054
        %v1345 = vadd.f32 %v1281, -1.4531521
        %v1346 = vadd.f32 %v1282, -1.4531521
        %v1347 = vadd.f32 %v1283, -1.4531521
        %v1348 = vadd.f32 %v1284, -1.4531521
        %v1349 = vadd.f32 %v1285, -1.4531521
        %v1350 = vadd.f32 %v1286, -1.4531521
        %v1351 = vadd.f32 %v1287, -1.4531521
        %v1352 = vadd.f32 %v1288, -1.4531521
        %v1353 = vadd.f32 %v1289, -1.4531521
        %v1354 = vadd.f32 %v1290, -1.4531521
        %v1355 = vadd.f32 %v1291, -1.4531521
        %v1356 = vadd.f32 %v1292, -1.4531521
        %v1357 = vadd.f32 %v1293, -1.4531521
        %v1358 = vadd.f32 %v1294, -1.4531521
        %v1359 = vadd.f32 %v1295, -1.4531521
        %v1360 = vadd.f32 %v1296, -1.4531521
        %v1361 = vadd.f32 %v1297, -1.4531521
        %v1362 = vadd.f32 %v1298, -1.4531521
        %v1363 = vadd.f32 %v1299, -1.4531521
        %v1364 = vadd.f32 %v1300, -1.4531521
        %v1365 = vadd.f32 %v1301, -1.4531521
        %v1366 = vadd.f32 %v1302, -1.4531521
        %v1367 = vadd.f32 %v1303, -1.4531521
        %v1368 = vadd.f32 %v1304, -1.4531521
        %v1369 = vadd.f32 %v1305, -1.4531521
        %v1370 = vadd.f32 %v1306, -1.4531521
        %v1371 = vadd.f32 %v1307, -1.4531521
        %v1372 = vadd.f32 %v1308, -1.4531521
        %v1373 = vadd.f32 %v1309, -1.4531521
        %v1374 = vadd.f32 %v1310, -1.4531521
        %v1375 = vadd.f32 %v1311, -1.4531521
        %v1376 = vadd.f32 %v1312, -1.4531521
        %v1377 = vadd.f32 %v1313, -1.4531521
        %v1378 = vadd.f32 %v1314, -1.4531521
        %v1379 = vadd.f32 %v1315, -1.4531521
        %v1380 = vadd.f32 %v1316, -1.4531521
        %v1381 = vadd.f32 %v1317, -1.4531521
        %v1382 = vadd.f32 %v1318, -1.4531521
        %v1383 = vadd.f32 %v1319, -1.4531521
        %v1384 = vadd.f32 %v1320, -1.4531521
        %v1385 = vadd.f32 %v1321, -1.4531521
        %v1386 = vadd.f32 %v1322, -1.4531521
        %v1387 = vadd.f32 %v1323, -1.4531521
        %v1388 = vadd.f32 %v1324, -1.4531521
        %v1389 = vadd.f32 %v1325, -1.4531521
        %v1390 = vadd.f32 %v1326, -1.4531521
        %v1391 = vadd.f32 %v1327, -1.4531521
        %v1392 = vadd.f32 %v1328, -1.4531521
        %v1393 = vadd.f32 %v1329, -1.4531521
        %v1394 = vadd.f32 %v1330, -1.4531521
        %v1395 = vadd.f32 %v1331, -1.4531521
        %v1396 = vadd.f32 %v1332, -1.4531521
        %v1397 = vadd.f32 %v1333, -1.4531521
        %v1398 = vadd.f32 %v1334, -1.4531521
        %v1399 = vadd.f32 %v1335, -1.4531521
        %v1400 = vadd.f32 %v1336, -1.4531521
        %v1401 = vadd.f32 %v1337, -1.4531521
        %v1402 = vadd.f32 %v1338, -1.4531521
        %v1403 = vadd.f32 %v1339, -1.4531521
        %v1404 = vadd.f32 %v1340, -1.4531521
        %v1405 = vadd.f32 %v1341, -1.4531521
        %v1406 = vadd.f32 %v1342, -1.4531521
        %v1407 = vadd.f32 %v1343, -1.4531521
        %v1408 = vadd.f32 %v1344, -1.4531521
        %v1409 = vmul.f32 %v1345, %v1154
        %v1410 = vmul.f32 %v1346, %v1156
        %v1411 = vmul.f32 %v1347, %v1158
        %v1412 = vmul.f32 %v1348, %v1160
        %v1413 = vmul.f32 %v1349, %v1162
        %v1414 = vmul.f32 %v1350, %v1164
        %v1415 = vmul.f32 %v1351, %v1166
        %v1416 = vmul.f32 %v1352, %v1168
        %v1417 = vmul.f32 %v1353, %v1170
        %v1418 = vmul.f32 %v1354, %v1172
        %v1419 = vmul.f32 %v1355, %v1174
        %v1420 = vmul.f32 %v1356, %v1176
        %v1421 = vmul.f32 %v1357, %v1178
        %v1422 = vmul.f32 %v1358, %v1180
        %v1423 = vmul.f32 %v1359, %v1182
        %v1424 = vmul.f32 %v1360, %v1184
        %v1425 = vmul.f32 %v1361, %v1186
        %v1426 = vmul.f32 %v1362, %v1188
        %v1427 = vmul.f32 %v1363, %v1190
        %v1428 = vmul.f32 %v1364, %v1192
        %v1429 = vmul.f32 %v1365, %v1194
        %v1430 = vmul.f32 %v1366, %v1196
        %v1431 = vmul.f32 %v1367, %v1198
        %v1432 = vmul.f32 %v1368, %v1200
        %v1433 = vmul.f32 %v1369, %v1202
        %v1434 = vmul.f32 %v1370, %v1204
        %v1435 = vmul.f32 %v1371, %v1206
        %v1436 = vmul.f32 %v1372, %v1208
        %v1437 = vmul.f32 %v1373, %v1210
        %v1438 = vmul.f32 %v1374, %v1212
        %v1439 = vmul.f32 %v1375, %v1214
        %v1440 = vmul.f32 %v1376, %v1216
        %v1441 = vmul.f32 %v1377, %v1218
        %v1442 = vmul.f32 %v1378, %v1220
        %v1443 = vmul.f32 %v1379, %v1222
        %v1444 = vmul.f32 %v1380, %v1224
        %v1445 = vmul.f32 %v1381, %v1226
        %v1446 = vmul.f32 %v1382, %v1228
        %v1447 = vmul.f32 %v1383, %v1230
        %v1448 = vmul.f32 %v1384, %v1232
        %v1449 = vmul.f32 %v1385, %v1234
        %v1450 = vmul.f32 %v1386, %v1236
        %v1451 = vmul.f32 %v1387, %v1238
        %v1452 = vmul.f32 %v1388, %v1240
        %v1453 = vmul.f32 %v1389, %v1242
        %v1454 = vmul.f32 %v1390, %v1244
        %v1455 = vmul.f32 %v1391, %v1246
        %v1456 = vmul.f32 %v1392, %v1248
        %v1457 = vmul.f32 %v1393, %v1250
        %v1458 = vmul.f32 %v1394, %v1252
        %v1459 = vmul.f32 %v1395, %v1254
        %v1460 = vmul.f32 %v1396, %v1256
        %v1461 = vmul.f32 %v1397, %v1258
        %v1462 = vmul.f32 %v1398, %v1260
        %v1463 = vmul.f32 %v1399, %v1262
        %v1464 = vmul.f32 %v1400, %v1264
        %v1465 = vmul.f32 %v1401, %v1266
        %v1466 = vmul.f32 %v1402, %v1268
        %v1467 = vmul.f32 %v1403, %v1270
        %v1468 = vmul.f32 %v1404, %v1272
        %v1469 = vmul.f32 %v1405, %v1274
        %v1470 = vmul.f32 %v1406, %v1276
        %v1471 = vmul.f32 %v1407, %v1278
        %v1472 = vmul.f32 %v1408, %v1280
        %v1473 = vadd.f32 %v1409, 1.4214138
        %v1474 = vadd.f32 %v1410, 1.4214138
        %v1475 = vadd.f32 %v1411, 1.4214138
        %v1476 = vadd.f32 %v1412, 1.4214138
        %v1477 = vadd.f32 %v1413, 1.4214138
        %v1478 = vadd.f32 %v1414, 1.4214138
        %v1479 = vadd.f32 %v1415, 1.4214138
        %v1480 = vadd.f32 %v1416, 1.4214138
        %v1481 = vadd.f32 %v1417, 1.4214138
        %v1482 = vadd.f32 %v1418, 1.4214138
        %v1483 = vadd.f32 %v1419, 1.4214138
        %v1484 = vadd.f32 %v1420, 1.4214138
        %v1485 = vadd.f32 %v1421, 1.4214138
        %v1486 = vadd.f32 %v1422, 1.4214138
        %v1487 = vadd.f32 %v1423, 1.4214138
        %v1488 = vadd.f32 %v1424, 1.4214138
        %v1489 = vadd.f32 %v1425, 1.4214138
        %v1490 = vadd.f32 %v1426, 1.4214138
        %v1491 = vadd.f32 %v1427, 1.4214138
        %v1492 = vadd.f32 %v1428, 1.4214138
        %v1493 = vadd.f32 %v1429, 1.4214138
        %v1494 = vadd.f32 %v1430, 1.4214138
        %v1495 = vadd.f32 %v1431, 1.4214138
        %v1496 = vadd.f32 %v1432, 1.4214138
        %v1497 = vadd.f32 %v1433, 1.4214138
        %v1498 = vadd.f32 %v1434, 1.4214138
        %v1499 = vadd.f32 %v1435, 1.4214138
        %v1500 = vadd.f32 %v1436, 1.4214138
        %v1501 = vadd.f32 %v1437, 1.4214138
        %v1502 = vadd.f32 %v1438, 1.4214138
        %v1503 = vadd.f32 %v1439, 1.4214138
        %v1504 = vadd.f32 %v1440, 1.4214138
        %v1505 = vadd.f32 %v1441, 1.4214138
        %v1506 = vadd.f32 %v1442, 1.4214138
        %v1507 = vadd.f32 %v1443, 1.4214138
        %v1508 = vadd.f32 %v1444, 1.4214138
        %v1509 = vadd.f32 %v1445, 1.4214138
        %v1510 = vadd.f32 %v1446, 1.4214138
        %v1511 = vadd.f32 %v1447, 1.4214138
        %v1512 = vadd.f32 %v1448, 1.4214138
        %v1513 = vadd.f32 %v1449, 1.4214138
        %v1514 = vadd.f32 %v1450, 1.4214138
        %v1515 = vadd.f32 %v1451, 1.4214138
        %v1516 = vadd.f32 %v1452, 1.4214138
        %v1517 = vadd.f32 %v1453, 1.4214138
        %v1518 = vadd.f32 %v1454, 1.4214138
        %v1519 = vadd.f32 %v1455, 1.4214138
        %v1520 = vadd.f32 %v1456, 1.4214138
        %v1521 = vadd.f32 %v1457, 1.4214138
        %v1522 = vadd.f32 %v1458, 1.4214138
        %v1523 = vadd.f32 %v1459, 1.4214138
        %v1524 = vadd.f32 %v1460, 1.4214138
        %v1525 = vadd.f32 %v1461, 1.4214138
        %v1526 = vadd.f32 %v1462, 1.4214138
        %v1527 = vadd.f32 %v1463, 1.4214138
        %v1528 = vadd.f32 %v1464, 1.4214138
        %v1529 = vadd.f32 %v1465, 1.4214138
        %v1530 = vadd.f32 %v1466, 1.4214138
        %v1531 = vadd.f32 %v1467, 1.4214138
        %v1532 = vadd.f32 %v1468, 1.4214138
        %v1533 = vadd.f32 %v1469, 1.4214138
        %v1534 = vadd.f32 %v1470, 1.4214138
        %v1535 = vadd.f32 %v1471, 1.4214138
        %v1536 = vadd.f32 %v1472, 1.4214138
        %v1537 = vmul.f32 %v1473, %v1154
        %v1538 = vmul.f32 %v1474, %v1156
        %v1539 = vmul.f32 %v1475, %v1158
        %v1540 = vmul.f32 %v1476, %v1160
        %v1541 = vmul.f32 %v1477, %v1162
        %v1542 = vmul.f32 %v1478, %v1164
        %v1543 = vmul.f32 %v1479, %v1166
        %v1544 = vmul.f32 %v1480, %v1168
        %v1545 = vmul.f32 %v1481, %v1170
        %v1546 = vmul.f32 %v1482, %v1172
        %v1547 = vmul.f32 %v1483, %v1174
        %v1548 = vmul.f32 %v1484, %v1176
        %v1549 = vmul.f32 %v1485, %v1178
        %v1550 = vmul.f32 %v1486, %v1180
        %v1551 = vmul.f32 %v1487, %v1182
        %v1552 = vmul.f32 %v1488, %v1184
        %v1553 = vmul.f32 %v1489, %v1186
        %v1554 = vmul.f32 %v1490, %v1188
        %v1555 = vmul.f32 %v1491, %v1190
        %v1556 = vmul.f32 %v1492, %v1192
        %v1557 = vmul.f32 %v1493, %v1194
        %v1558 = vmul.f32 %v1494, %v1196
        %v1559 = vmul.f32 %v1495, %v1198
        %v1560 = vmul.f32 %v1496, %v1200
        %v1561 = vmul.f32 %v1497, %v1202
        %v1562 = vmul.f32 %v1498, %v1204
        %v1563 = vmul.f32 %v1499, %v1206
        %v1564 = vmul.f32 %v1500, %v1208
        %v1565 = vmul.f32 %v1501, %v1210
        %v1566 = vmul.f32 %v1502, %v1212
        %v1567 = vmul.f32 %v1503, %v1214
        %v1568 = vmul.f32 %v1504, %v1216
        %v1569 = vmul.f32 %v1505, %v1218
        %v1570 = vmul.f32 %v1506, %v1220
        %v1571 = vmul.f32 %v1507, %v1222
        %v1572 = vmul.f32 %v1508, %v1224
        %v1573 = vmul.f32 %v1509, %v1226
        %v1574 = vmul.f32 %v1510, %v1228
        %v1575 = vmul.f32 %v1511, %v1230
        %v1576 = vmul.f32 %v1512, %v1232
        %v1577 = vmul.f32 %v1513, %v1234
        %v1578 = vmul.f32 %v1514, %v1236
        %v1579 = vmul.f32 %v1515, %v1238
        %v1580 = vmul.f32 %v1516, %v1240
        %v1581 = vmul.f32 %v1517, %v1242
        %v1582 = vmul.f32 %v1518, %v1244
        %v1583 = vmul.f32 %v1519, %v1246
        %v1584 = vmul.f32 %v1520, %v1248
        %v1585 = vmul.f32 %v1521, %v1250
        %v1586 = vmul.f32 %v1522, %v1252
        %v1587 = vmul.f32 %v1523, %v1254
        %v1588 = vmul.f32 %v1524, %v1256
        %v1589 = vmul.f32 %v1525, %v1258
        %v1590 = vmul.f32 %v1526, %v1260
        %v1591 = vmul.f32 %v1527, %v1262
        %v1592 = vmul.f32 %v1528, %v1264
        %v1593 = vmul.f32 %v1529, %v1266
        %v1594 = vmul.f32 %v1530, %v1268
        %v1595 = vmul.f32 %v1531, %v1270
        %v1596 = vmul.f32 %v1532, %v1272
        %v1597 = vmul.f32 %v1533, %v1274
        %v1598 = vmul.f32 %v1534, %v1276
        %v1599 = vmul.f32 %v1535, %v1278
        %v1600 = vmul.f32 %v1536, %v1280
        %v1601 = vadd.f32 %v1537, -0.28449672
        %v1602 = vadd.f32 %v1538, -0.28449672
        %v1603 = vadd.f32 %v1539, -0.28449672
        %v1604 = vadd.f32 %v1540, -0.28449672
        %v1605 = vadd.f32 %v1541, -0.28449672
        %v1606 = vadd.f32 %v1542, -0.28449672
        %v1607 = vadd.f32 %v1543, -0.28449672
        %v1608 = vadd.f32 %v1544, -0.28449672
        %v1609 = vadd.f32 %v1545, -0.28449672
        %v1610 = vadd.f32 %v1546, -0.28449672
        %v1611 = vadd.f32 %v1547, -0.28449672
        %v1612 = vadd.f32 %v1548, -0.28449672
        %v1613 = vadd.f32 %v1549, -0.28449672
        %v1614 = vadd.f32 %v1550, -0.28449672
        %v1615 = vadd.f32 %v1551, -0.28449672
        %v1616 = vadd.f32 %v1552, -0.28449672
        %v1617 = vadd.f32 %v1553, -0.28449672
        %v1618 = vadd.f32 %v1554, -0.28449672
        %v1619 = vadd.f32 %v1555, -0.28449672
        %v1620 = vadd.f32 %v1556, -0.28449672
        %v1621 = vadd.f32 %v1557, -0.28449672
        %v1622 = vadd.f32 %v1558, -0.28449672
        %v1623 = vadd.f32 %v1559, -0.28449672
        %v1624 = vadd.f32 %v1560, -0.28449672
        %v1625 = vadd.f32 %v1561, -0.28449672
        %v1626 = vadd.f32 %v1562, -0.28449672
        %v1627 = vadd.f32 %v1563, -0.28449672
        %v1628 = vadd.f32 %v1564, -0.28449672
        %v1629 = vadd.f32 %v1565, -0.28449672
        %v1630 = vadd.f32 %v1566, -0.28449672
        %v1631 = vadd.f32 %v1567, -0.28449672
        %v1632 = vadd.f32 %v1568, -0.28449672
        %v1633 = vadd.f32 %v1569, -0.28449672
        %v1634 = vadd.f32 %v1570, -0.28449672
        %v1635 = vadd.f32 %v1571, -0.28449672
        %v1636 = vadd.f32 %v1572, -0.28449672
        %v1637 = vadd.f32 %v1573, -0.28449672
        %v1638 = vadd.f32 %v1574, -0.28449672
        %v1639 = vadd.f32 %v1575, -0.28449672
        %v1640 = vadd.f32 %v1576, -0.28449672
        %v1641 = vadd.f32 %v1577, -0.28449672
        %v1642 = vadd.f32 %v1578, -0.28449672
        %v1643 = vadd.f32 %v1579, -0.28449672
        %v1644 = vadd.f32 %v1580, -0.28449672
        %v1645 = vadd.f32 %v1581, -0.28449672
        %v1646 = vadd.f32 %v1582, -0.28449672
        %v1647 = vadd.f32 %v1583, -0.28449672
        %v1648 = vadd.f32 %v1584, -0.28449672
        %v1649 = vadd.f32 %v1585, -0.28449672
        %v1650 = vadd.f32 %v1586, -0.28449672
        %v1651 = vadd.f32 %v1587, -0.28449672
        %v1652 = vadd.f32 %v1588, -0.28449672
        %v1653 = vadd.f32 %v1589, -0.28449672
        %v1654 = vadd.f32 %v1590, -0.28449672
        %v1655 = vadd.f32 %v1591, -0.28449672
        %v1656 = vadd.f32 %v1592, -0.28449672
        %v1657 = vadd.f32 %v1593, -0.28449672
        %v1658 = vadd.f32 %v1594, -0.28449672
        %v1659 = vadd.f32 %v1595, -0.28449672
        %v1660 = vadd.f32 %v1596, -0.28449672
        %v1661 = vadd.f32 %v1597, -0.28449672
        %v1662 = vadd.f32 %v1598, -0.28449672
        %v1663 = vadd.f32 %v1599, -0.28449672
        %v1664 = vadd.f32 %v1600, -0.28449672
        %v1665 = vmul.f32 %v1601, %v1154
        %v1666 = vmul.f32 %v1602, %v1156
        %v1667 = vmul.f32 %v1603, %v1158
        %v1668 = vmul.f32 %v1604, %v1160
        %v1669 = vmul.f32 %v1605, %v1162
        %v1670 = vmul.f32 %v1606, %v1164
        %v1671 = vmul.f32 %v1607, %v1166
        %v1672 = vmul.f32 %v1608, %v1168
        %v1673 = vmul.f32 %v1609, %v1170
        %v1674 = vmul.f32 %v1610, %v1172
        %v1675 = vmul.f32 %v1611, %v1174
        %v1676 = vmul.f32 %v1612, %v1176
        %v1677 = vmul.f32 %v1613, %v1178
        %v1678 = vmul.f32 %v1614, %v1180
        %v1679 = vmul.f32 %v1615, %v1182
        %v1680 = vmul.f32 %v1616, %v1184
        %v1681 = vmul.f32 %v1617, %v1186
        %v1682 = vmul.f32 %v1618, %v1188
        %v1683 = vmul.f32 %v1619, %v1190
        %v1684 = vmul.f32 %v1620, %v1192
        %v1685 = vmul.f32 %v1621, %v1194
        %v1686 = vmul.f32 %v1622, %v1196
        %v1687 = vmul.f32 %v1623, %v1198
        %v1688 = vmul.f32 %v1624, %v1200
        %v1689 = vmul.f32 %v1625, %v1202
        %v1690 = vmul.f32 %v1626, %v1204
        %v1691 = vmul.f32 %v1627, %v1206
        %v1692 = vmul.f32 %v1628, %v1208
        %v1693 = vmul.f32 %v1629, %v1210
        %v1694 = vmul.f32 %v1630, %v1212
        %v1695 = vmul.f32 %v1631, %v1214
        %v1696 = vmul.f32 %v1632, %v1216
        %v1697 = vmul.f32 %v1633, %v1218
        %v1698 = vmul.f32 %v1634, %v1220
        %v1699 = vmul.f32 %v1635, %v1222
        %v1700 = vmul.f32 %v1636, %v1224
        %v1701 = vmul.f32 %v1637, %v1226
        %v1702 = vmul.f32 %v1638, %v1228
        %v1703 = vmul.f32 %v1639, %v1230
        %v1704 = vmul.f32 %v1640, %v1232
        %v1705 = vmul.f32 %v1641, %v1234
        %v1706 = vmul.f32 %v1642, %v1236
        %v1707 = vmul.f32 %v1643, %v1238
        %v1708 = vmul.f32 %v1644, %v1240
        %v1709 = vmul.f32 %v1645, %v1242
        %v1710 = vmul.f32 %v1646, %v1244
        %v1711 = vmul.f32 %v1647, %v1246
        %v1712 = vmul.f32 %v1648, %v1248
        %v1713 = vmul.f32 %v1649, %v1250
        %v1714 = vmul.f32 %v1650, %v1252
        %v1715 = vmul.f32 %v1651, %v1254
        %v1716 = vmul.f32 %v1652, %v1256
        %v1717 = vmul.f32 %v1653, %v1258
        %v1718 = vmul.f32 %v1654, %v1260
        %v1719 = vmul.f32 %v1655, %v1262
        %v1720 = vmul.f32 %v1656, %v1264
        %v1721 = vmul.f32 %v1657, %v1266
        %v1722 = vmul.f32 %v1658, %v1268
        %v1723 = vmul.f32 %v1659, %v1270
        %v1724 = vmul.f32 %v1660, %v1272
        %v1725 = vmul.f32 %v1661, %v1274
        %v1726 = vmul.f32 %v1662, %v1276
        %v1727 = vmul.f32 %v1663, %v1278
        %v1728 = vmul.f32 %v1664, %v1280
        %v1729 = vadd.f32 %v1665, 0.2548296
        %v1730 = vadd.f32 %v1666, 0.2548296
        %v1731 = vadd.f32 %v1667, 0.2548296
        %v1732 = vadd.f32 %v1668, 0.2548296
        %v1733 = vadd.f32 %v1669, 0.2548296
        %v1734 = vadd.f32 %v1670, 0.2548296
        %v1735 = vadd.f32 %v1671, 0.2548296
        %v1736 = vadd.f32 %v1672, 0.2548296
        %v1737 = vadd.f32 %v1673, 0.2548296
        %v1738 = vadd.f32 %v1674, 0.2548296
        %v1739 = vadd.f32 %v1675, 0.2548296
        %v1740 = vadd.f32 %v1676, 0.2548296
        %v1741 = vadd.f32 %v1677, 0.2548296
        %v1742 = vadd.f32 %v1678, 0.2548296
        %v1743 = vadd.f32 %v1679, 0.2548296
        %v1744 = vadd.f32 %v1680, 0.2548296
        %v1745 = vadd.f32 %v1681, 0.2548296
        %v1746 = vadd.f32 %v1682, 0.2548296
        %v1747 = vadd.f32 %v1683, 0.2548296
        %v1748 = vadd.f32 %v1684, 0.2548296
        %v1749 = vadd.f32 %v1685, 0.2548296
        %v1750 = vadd.f32 %v1686, 0.2548296
        %v1751 = vadd.f32 %v1687, 0.2548296
        %v1752 = vadd.f32 %v1688, 0.2548296
        %v1753 = vadd.f32 %v1689, 0.2548296
        %v1754 = vadd.f32 %v1690, 0.2548296
        %v1755 = vadd.f32 %v1691, 0.2548296
        %v1756 = vadd.f32 %v1692, 0.2548296
        %v1757 = vadd.f32 %v1693, 0.2548296
        %v1758 = vadd.f32 %v1694, 0.2548296
        %v1759 = vadd.f32 %v1695, 0.2548296
        %v1760 = vadd.f32 %v1696, 0.2548296
        %v1761 = vadd.f32 %v1697, 0.2548296
        %v1762 = vadd.f32 %v1698, 0.2548296
        %v1763 = vadd.f32 %v1699, 0.2548296
        %v1764 = vadd.f32 %v1700, 0.2548296
        %v1765 = vadd.f32 %v1701, 0.2548296
        %v1766 = vadd.f32 %v1702, 0.2548296
        %v1767 = vadd.f32 %v1703, 0.2548296
        %v1768 = vadd.f32 %v1704, 0.2548296
        %v1769 = vadd.f32 %v1705, 0.2548296
        %v1770 = vadd.f32 %v1706, 0.2548296
        %v1771 = vadd.f32 %v1707, 0.2548296
        %v1772 = vadd.f32 %v1708, 0.2548296
        %v1773 = vadd.f32 %v1709, 0.2548296
        %v1774 = vadd.f32 %v1710, 0.2548296
        %v1775 = vadd.f32 %v1711, 0.2548296
        %v1776 = vadd.f32 %v1712, 0.2548296
        %v1777 = vadd.f32 %v1713, 0.2548296
        %v1778 = vadd.f32 %v1714, 0.2548296
        %v1779 = vadd.f32 %v1715, 0.2548296
        %v1780 = vadd.f32 %v1716, 0.2548296
        %v1781 = vadd.f32 %v1717, 0.2548296
        %v1782 = vadd.f32 %v1718, 0.2548296
        %v1783 = vadd.f32 %v1719, 0.2548296
        %v1784 = vadd.f32 %v1720, 0.2548296
        %v1785 = vadd.f32 %v1721, 0.2548296
        %v1786 = vadd.f32 %v1722, 0.2548296
        %v1787 = vadd.f32 %v1723, 0.2548296
        %v1788 = vadd.f32 %v1724, 0.2548296
        %v1789 = vadd.f32 %v1725, 0.2548296
        %v1790 = vadd.f32 %v1726, 0.2548296
        %v1791 = vadd.f32 %v1727, 0.2548296
        %v1792 = vadd.f32 %v1728, 0.2548296
        %v1793 = vmul.f32 %v1729, %v1154
        %v1794 = vmul.f32 %v1730, %v1156
        %v1795 = vmul.f32 %v1731, %v1158
        %v1796 = vmul.f32 %v1732, %v1160
        %v1797 = vmul.f32 %v1733, %v1162
        %v1798 = vmul.f32 %v1734, %v1164
        %v1799 = vmul.f32 %v1735, %v1166
        %v1800 = vmul.f32 %v1736, %v1168
        %v1801 = vmul.f32 %v1737, %v1170
        %v1802 = vmul.f32 %v1738, %v1172
        %v1803 = vmul.f32 %v1739, %v1174
        %v1804 = vmul.f32 %v1740, %v1176
        %v1805 = vmul.f32 %v1741, %v1178
        %v1806 = vmul.f32 %v1742, %v1180
        %v1807 = vmul.f32 %v1743, %v1182
        %v1808 = vmul.f32 %v1744, %v1184
        %v1809 = vmul.f32 %v1745, %v1186
        %v1810 = vmul.f32 %v1746, %v1188
        %v1811 = vmul.f32 %v1747, %v1190
        %v1812 = vmul.f32 %v1748, %v1192
        %v1813 = vmul.f32 %v1749, %v1194
        %v1814 = vmul.f32 %v1750, %v1196
        %v1815 = vmul.f32 %v1751, %v1198
        %v1816 = vmul.f32 %v1752, %v1200
        %v1817 = vmul.f32 %v1753, %v1202
        %v1818 = vmul.f32 %v1754, %v1204
        %v1819 = vmul.f32 %v1755, %v1206
        %v1820 = vmul.f32 %v1756, %v1208
        %v1821 = vmul.f32 %v1757, %v1210
        %v1822 = vmul.f32 %v1758, %v1212
        %v1823 = vmul.f32 %v1759, %v1214
        %v1824 = vmul.f32 %v1760, %v1216
        %v1825 = vmul.f32 %v1761, %v1218
        %v1826 = vmul.f32 %v1762, %v1220
        %v1827 = vmul.f32 %v1763, %v1222
        %v1828 = vmul.f32 %v1764, %v1224
        %v1829 = vmul.f32 %v1765, %v1226
        %v1830 = vmul.f32 %v1766, %v1228
        %v1831 = vmul.f32 %v1767, %v1230
        %v1832 = vmul.f32 %v1768, %v1232
        %v1833 = vmul.f32 %v1769, %v1234
        %v1834 = vmul.f32 %v1770, %v1236
        %v1835 = vmul.f32 %v1771, %v1238
        %v1836 = vmul.f32 %v1772, %v1240
        %v1837 = vmul.f32 %v1773, %v1242
        %v1838 = vmul.f32 %v1774, %v1244
        %v1839 = vmul.f32 %v1775, %v1246
        %v1840 = vmul.f32 %v1776, %v1248
        %v1841 = vmul.f32 %v1777, %v1250
        %v1842 = vmul.f32 %v1778, %v1252
        %v1843 = vmul.f32 %v1779, %v1254
        %v1844 = vmul.f32 %v1780, %v1256
        %v1845 = vmul.f32 %v1781, %v1258
        %v1846 = vmul.f32 %v1782, %v1260
        %v1847 = vmul.f32 %v1783, %v1262
        %v1848 = vmul.f32 %v1784, %v1264
        %v1849 = vmul.f32 %v1785, %v1266
        %v1850 = vmul.f32 %v1786, %v1268
        %v1851 = vmul.f32 %v1787, %v1270
        %v1852 = vmul.f32 %v1788, %v1272
        %v1853 = vmul.f32 %v1789, %v1274
        %v1854 = vmul.f32 %v1790, %v1276
        %v1855 = vmul.f32 %v1791, %v1278
        %v1856 = vmul.f32 %v1792, %v1280
        %v1857 = vsub.f32 0.0, %v961
        %v1858 = vsub.f32 0.0, %v962
        %v1859 = vsub.f32 0.0, %v963
        %v1860 = vsub.f32 0.0, %v964
        %v1861 = vsub.f32 0.0, %v965
        %v1862 = vsub.f32 0.0, %v966
        %v1863 = vsub.f32 0.0, %v967
        %v1864 = vsub.f32 0.0, %v968
        %v1865 = vsub.f32 0.0, %v969
        %v1866 = vsub.f32 0.0, %v970
        %v1867 = vsub.f32 0.0, %v971
        %v1868 = vsub.f32 0.0, %v972
        %v1869 = vsub.f32 0.0, %v973
        %v1870 = vsub.f32 0.0, %v974
        %v1871 = vsub.f32 0.0, %v975
        %v1872 = vsub.f32 0.0, %v976
        %v1873 = vsub.f32 0.0, %v977
        %v1874 = vsub.f32 0.0, %v978
        %v1875 = vsub.f32 0.0, %v979
        %v1876 = vsub.f32 0.0, %v980
        %v1877 = vsub.f32 0.0, %v981
        %v1878 = vsub.f32 0.0, %v982
        %v1879 = vsub.f32 0.0, %v983
        %v1880 = vsub.f32 0.0, %v984
        %v1881 = vsub.f32 0.0, %v985
        %v1882 = vsub.f32 0.0, %v986
        %v1883 = vsub.f32 0.0, %v987
        %v1884 = vsub.f32 0.0, %v988
        %v1885 = vsub.f32 0.0, %v989
        %v1886 = vsub.f32 0.0, %v990
        %v1887 = vsub.f32 0.0, %v991
        %v1888 = vsub.f32 0.0, %v992
        %v1889 = vsub.f32 0.0, %v993
        %v1890 = vsub.f32 0.0, %v994
        %v1891 = vsub.f32 0.0, %v995
        %v1892 = vsub.f32 0.0, %v996
        %v1893 = vsub.f32 0.0, %v997
        %v1894 = vsub.f32 0.0, %v998
        %v1895 = vsub.f32 0.0, %v999
        %v1896 = vsub.f32 0.0, %v1000
        %v1897 = vsub.f32 0.0, %v1001
        %v1898 = vsub.f32 0.0, %v1002
        %v1899 = vsub.f32 0.0, %v1003
        %v1900 = vsub.f32 0.0, %v1004
        %v1901 = vsub.f32 0.0, %v1005
        %v1902 = vsub.f32 0.0, %v1006
        %v1903 = vsub.f32 0.0, %v1007
        %v1904 = vsub.f32 0.0, %v1008
        %v1905 = vsub.f32 0.0, %v1009
        %v1906 = vsub.f32 0.0, %v1010
        %v1907 = vsub.f32 0.0, %v1011
        %v1908 = vsub.f32 0.0, %v1012
        %v1909 = vsub.f32 0.0, %v1013
        %v1910 = vsub.f32 0.0, %v1014
        %v1911 = vsub.f32 0.0, %v1015
        %v1912 = vsub.f32 0.0, %v1016
        %v1913 = vsub.f32 0.0, %v1017
        %v1914 = vsub.f32 0.0, %v1018
        %v1915 = vsub.f32 0.0, %v1019
        %v1916 = vsub.f32 0.0, %v1020
        %v1917 = vsub.f32 0.0, %v1021
        %v1918 = vsub.f32 0.0, %v1022
        %v1919 = vsub.f32 0.0, %v1023
        %v1920 = vsub.f32 0.0, %v1024
        %v1921 = vmul.f32 %v1857, %v961
        %v1922 = vmul.f32 %v1858, %v962
        %v1923 = vmul.f32 %v1859, %v963
        %v1924 = vmul.f32 %v1860, %v964
        %v1925 = vmul.f32 %v1861, %v965
        %v1926 = vmul.f32 %v1862, %v966
        %v1927 = vmul.f32 %v1863, %v967
        %v1928 = vmul.f32 %v1864, %v968
        %v1929 = vmul.f32 %v1865, %v969
        %v1930 = vmul.f32 %v1866, %v970
        %v1931 = vmul.f32 %v1867, %v971
        %v1932 = vmul.f32 %v1868, %v972
        %v1933 = vmul.f32 %v1869, %v973
        %v1934 = vmul.f32 %v1870, %v974
        %v1935 = vmul.f32 %v1871, %v975
        %v1936 = vmul.f32 %v1872, %v976
        %v1937 = vmul.f32 %v1873, %v977
        %v1938 = vmul.f32 %v1874, %v978
        %v1939 = vmul.f32 %v1875, %v979
        %v1940 = vmul.f32 %v1876, %v980
        %v1941 = vmul.f32 %v1877, %v981
        %v1942 = vmul.f32 %v1878, %v982
        %v1943 = vmul.f32 %v1879, %v983
        %v1944 = vmul.f32 %v1880, %v984
        %v1945 = vmul.f32 %v1881, %v985
        %v1946 = vmul.f32 %v1882, %v986
        %v1947 = vmul.f32 %v1883, %v987
        %v1948 = vmul.f32 %v1884, %v988
        %v1949 = vmul.f32 %v1885, %v989
        %v1950 = vmul.f32 %v1886, %v990
        %v1951 = vmul.f32 %v1887, %v991
        %v1952 = vmul.f32 %v1888, %v992
        %v1953 = vmul.f32 %v1889, %v993
        %v1954 = vmul.f32 %v1890, %v994
        %v1955 = vmul.f32 %v1891, %v995
        %v1956 = vmul.f32 %v1892, %v996
        %v1957 = vmul.f32 %v1893, %v997
        %v1958 = vmul.f32 %v1894, %v998
        %v1959 = vmul.f32 %v1895, %v999
        %v1960 = vmul.f32 %v1896, %v1000
        %v1961 = vmul.f32 %v1897, %v1001
        %v1962 = vmul.f32 %v1898, %v1002
        %v1963 = vmul.f32 %v1899, %v1003
        %v1964 = vmul.f32 %v1900, %v1004
        %v1965 = vmul.f32 %v1901, %v1005
        %v1966 = vmul.f32 %v1902, %v1006
        %v1967 = vmul.f32 %v1903, %v1007
        %v1968 = vmul.f32 %v1904, %v1008
        %v1969 = vmul.f32 %v1905, %v1009
        %v1970 = vmul.f32 %v1906, %v1010
        %v1971 = vmul.f32 %v1907, %v1011
        %v1972 = vmul.f32 %v1908, %v1012
        %v1973 = vmul.f32 %v1909, %v1013
        %v1974 = vmul.f32 %v1910, %v1014
        %v1975 = vmul.f32 %v1911, %v1015
        %v1976 = vmul.f32 %v1912, %v1016
        %v1977 = vmul.f32 %v1913, %v1017
        %v1978 = vmul.f32 %v1914, %v1018
        %v1979 = vmul.f32 %v1915, %v1019
        %v1980 = vmul.f32 %v1916, %v1020
        %v1981 = vmul.f32 %v1917, %v1021
        %v1982 = vmul.f32 %v1918, %v1022
        %v1983 = vmul.f32 %v1919, %v1023
        %v1984 = vmul.f32 %v1920, %v1024
        %v1985 = vmul.f32 %v1921, 1.442695
        %v1986 = vpow.pop %v1985
        %v1987 = vmul.f32 %v1922, 1.442695
        %v1988 = vpow.pop %v1987
        %v1989 = vmul.f32 %v1923, 1.442695
        %v1990 = vpow.pop %v1989
        %v1991 = vmul.f32 %v1924, 1.442695
        %v1992 = vpow.pop %v1991
        %v1993 = vmul.f32 %v1925, 1.442695
        %v1994 = vpow.pop %v1993
        %v1995 = vmul.f32 %v1926, 1.442695
        %v1996 = vpow.pop %v1995
        %v1997 = vmul.f32 %v1927, 1.442695
        %v1998 = vpow.pop %v1997
        %v1999 = vmul.f32 %v1928, 1.442695
        %v2000 = vpow.pop %v1999
        %v2001 = vmul.f32 %v1929, 1.442695
        %v2002 = vpow.pop %v2001
        %v2003 = vmul.f32 %v1930, 1.442695
        %v2004 = vpow.pop %v2003
        %v2005 = vmul.f32 %v1931, 1.442695
        %v2006 = vpow.pop %v2005
        %v2007 = vmul.f32 %v1932, 1.442695
        %v2008 = vpow.pop %v2007
        %v2009 = vmul.f32 %v1933, 1.442695
        %v2010 = vpow.pop %v2009
        %v2011 = vmul.f32 %v1934, 1.442695
        %v2012 = vpow.pop %v2011
        %v2013 = vmul.f32 %v1935, 1.442695
        %v2014 = vpow.pop %v2013
        %v2015 = vmul.f32 %v1936, 1.442695
        %v2016 = vpow.pop %v2015
        %v2017 = vmul.f32 %v1937, 1.442695
        %v2018 = vpow.pop %v2017
        %v2019 = vmul.f32 %v1938, 1.442695
        %v2020 = vpow.pop %v2019
        %v2021 = vmul.f32 %v1939, 1.442695
        %v2022 = vpow.pop %v2021
        %v2023 = vmul.f32 %v1940, 1.442695
        %v2024 = vpow.pop %v2023
        %v2025 = vmul.f32 %v1941, 1.442695
        %v2026 = vpow.pop %v2025
        %v2027 = vmul.f32 %v1942, 1.442695
        %v2028 = vpow.pop %v2027
        %v2029 = vmul.f32 %v1943, 1.442695
        %v2030 = vpow.pop %v2029
        %v2031 = vmul.f32 %v1944, 1.442695
        %v2032 = vpow.pop %v2031
        %v2033 = vmul.f32 %v1945, 1.442695
        %v2034 = vpow.pop %v2033
        %v2035 = vmul.f32 %v1946, 1.442695
        %v2036 = vpow.pop %v2035
        %v2037 = vmul.f32 %v1947, 1.442695
        %v2038 = vpow.pop %v2037
        %v2039 = vmul.f32 %v1948, 1.442695
        %v2040 = vpow.pop %v2039
        %v2041 = vmul.f32 %v1949, 1.442695
        %v2042 = vpow.pop %v2041
        %v2043 = vmul.f32 %v1950, 1.442695
        %v2044 = vpow.pop %v2043
        %v2045 = vmul.f32 %v1951, 1.442695
        %v2046 = vpow.pop %v2045
        %v2047 = vmul.f32 %v1952, 1.442695
        %v2048 = vpow.pop %v2047
        %v2049 = vmul.f32 %v1953, 1.442695
        %v2050 = vpow.pop %v2049
        %v2051 = vmul.f32 %v1954, 1.442695
        %v2052 = vpow.pop %v2051
        %v2053 = vmul.f32 %v1955, 1.442695
        %v2054 = vpow.pop %v2053
        %v2055 = vmul.f32 %v1956, 1.442695
        %v2056 = vpow.pop %v2055
        %v2057 = vmul.f32 %v1957, 1.442695
        %v2058 = vpow.pop %v2057
        %v2059 = vmul.f32 %v1958, 1.442695
        %v2060 = vpow.pop %v2059
        %v2061 = vmul.f32 %v1959, 1.442695
        %v2062 = vpow.pop %v2061
        %v2063 = vmul.f32 %v1960, 1.442695
        %v2064 = vpow.pop %v2063
        %v2065 = vmul.f32 %v1961, 1.442695
        %v2066 = vpow.pop %v2065
        %v2067 = vmul.f32 %v1962, 1.442695
        %v2068 = vpow.pop %v2067
        %v2069 = vmul.f32 %v1963, 1.442695
        %v2070 = vpow.pop %v2069
        %v2071 = vmul.f32 %v1964, 1.442695
        %v2072 = vpow.pop %v2071
        %v2073 = vmul.f32 %v1965, 1.442695
        %v2074 = vpow.pop %v2073
        %v2075 = vmul.f32 %v1966, 1.442695
        %v2076 = vpow.pop %v2075
        %v2077 = vmul.f32 %v1967, 1.442695
        %v2078 = vpow.pop %v2077
        %v2079 = vmul.f32 %v1968, 1.442695
        %v2080 = vpow.pop %v2079
        %v2081 = vmul.f32 %v1969, 1.442695
        %v2082 = vpow.pop %v2081
        %v2083 = vmul.f32 %v1970, 1.442695
        %v2084 = vpow.pop %v2083
        %v2085 = vmul.f32 %v1971, 1.442695
        %v2086 = vpow.pop %v2085
        %v2087 = vmul.f32 %v1972, 1.442695
        %v2088 = vpow.pop %v2087
        %v2089 = vmul.f32 %v1973, 1.442695
        %v2090 = vpow.pop %v2089
        %v2091 = vmul.f32 %v1974, 1.442695
        %v2092 = vpow.pop %v2091
        %v2093 = vmul.f32 %v1975, 1.442695
        %v2094 = vpow.pop %v2093
        %v2095 = vmul.f32 %v1976, 1.442695
        %v2096 = vpow.pop %v2095
        %v2097 = vmul.f32 %v1977, 1.442695
        %v2098 = vpow.pop %v2097
        %v2099 = vmul.f32 %v1978, 1.442695
        %v2100 = vpow.pop %v2099
        %v2101 = vmul.f32 %v1979, 1.442695
        %v2102 = vpow.pop %v2101
        %v2103 = vmul.f32 %v1980, 1.442695
        %v2104 = vpow.pop %v2103
        %v2105 = vmul.f32 %v1981, 1.442695
        %v2106 = vpow.pop %v2105
        %v2107 = vmul.f32 %v1982, 1.442695
        %v2108 = vpow.pop %v2107
        %v2109 = vmul.f32 %v1983, 1.442695
        %v2110 = vpow.pop %v2109
        %v2111 = vmul.f32 %v1984, 1.442695
        %v2112 = vpow.pop %v2111
        %v2113 = vmul.f32 %v1793, %v1986
        %v2114 = vmul.f32 %v1794, %v1988
        %v2115 = vmul.f32 %v1795, %v1990
        %v2116 = vmul.f32 %v1796, %v1992
        %v2117 = vmul.f32 %v1797, %v1994
        %v2118 = vmul.f32 %v1798, %v1996
        %v2119 = vmul.f32 %v1799, %v1998
        %v2120 = vmul.f32 %v1800, %v2000
        %v2121 = vmul.f32 %v1801, %v2002
        %v2122 = vmul.f32 %v1802, %v2004
        %v2123 = vmul.f32 %v1803, %v2006
        %v2124 = vmul.f32 %v1804, %v2008
        %v2125 = vmul.f32 %v1805, %v2010
        %v2126 = vmul.f32 %v1806, %v2012
        %v2127 = vmul.f32 %v1807, %v2014
        %v2128 = vmul.f32 %v1808, %v2016
        %v2129 = vmul.f32 %v1809, %v2018
        %v2130 = vmul.f32 %v1810, %v2020
        %v2131 = vmul.f32 %v1811, %v2022
        %v2132 = vmul.f32 %v1812, %v2024
        %v2133 = vmul.f32 %v1813, %v2026
        %v2134 = vmul.f32 %v1814, %v2028
        %v2135 = vmul.f32 %v1815, %v2030
        %v2136 = vmul.f32 %v1816, %v2032
        %v2137 = vmul.f32 %v1817, %v2034
        %v2138 = vmul.f32 %v1818, %v2036
        %v2139 = vmul.f32 %v1819, %v2038
        %v2140 = vmul.f32 %v1820, %v2040
        %v2141 = vmul.f32 %v1821, %v2042
        %v2142 = vmul.f32 %v1822, %v2044
        %v2143 = vmul.f32 %v1823, %v2046
        %v2144 = vmul.f32 %v1824, %v2048
        %v2145 = vmul.f32 %v1825, %v2050
        %v2146 = vmul.f32 %v1826, %v2052
        %v2147 = vmul.f32 %v1827, %v2054
        %v2148 = vmul.f32 %v1828, %v2056
        %v2149 = vmul.f32 %v1829, %v2058
        %v2150 = vmul.f32 %v1830, %v2060
        %v2151 = vmul.f32 %v1831, %v2062
        %v2152 = vmul.f32 %v1832, %v2064
        %v2153 = vmul.f32 %v1833, %v2066
        %v2154 = vmul.f32 %v1834, %v2068
        %v2155 = vmul.f32 %v1835, %v2070
        %v2156 = vmul.f32 %v1836, %v2072
        %v2157 = vmul.f32 %v1837, %v2074
        %v2158 = vmul.f32 %v1838, %v2076
        %v2159 = vmul.f32 %v1839, %v2078
        %v2160 = vmul.f32 %v1840, %v2080
        %v2161 = vmul.f32 %v1841, %v2082
        %v2162 = vmul.f32 %v1842, %v2084
        %v2163 = vmul.f32 %v1843, %v2086
        %v2164 = vmul.f32 %v1844, %v2088
        %v2165 = vmul.f32 %v1845, %v2090
        %v2166 = vmul.f32 %v1846, %v2092
        %v2167 = vmul.f32 %v1847, %v2094
        %v2168 = vmul.f32 %v1848, %v2096
        %v2169 = vmul.f32 %v1849, %v2098
        %v2170 = vmul.f32 %v1850, %v2100
        %v2171 = vmul.f32 %v1851, %v2102
        %v2172 = vmul.f32 %v1852, %v2104
        %v2173 = vmul.f32 %v1853, %v2106
        %v2174 = vmul.f32 %v1854, %v2108
        %v2175 = vmul.f32 %v1855, %v2110
        %v2176 = vmul.f32 %v1856, %v2112
        %v2177 = vsub.f32 1.0, %v2113
        %v2178 = vsub.f32 1.0, %v2114
        %v2179 = vsub.f32 1.0, %v2115
        %v2180 = vsub.f32 1.0, %v2116
        %v2181 = vsub.f32 1.0, %v2117
        %v2182 = vsub.f32 1.0, %v2118
        %v2183 = vsub.f32 1.0, %v2119
        %v2184 = vsub.f32 1.0, %v2120
        %v2185 = vsub.f32 1.0, %v2121
        %v2186 = vsub.f32 1.0, %v2122
        %v2187 = vsub.f32 1.0, %v2123
        %v2188 = vsub.f32 1.0, %v2124
        %v2189 = vsub.f32 1.0, %v2125
        %v2190 = vsub.f32 1.0, %v2126
        %v2191 = vsub.f32 1.0, %v2127
        %v2192 = vsub.f32 1.0, %v2128
        %v2193 = vsub.f32 1.0, %v2129
        %v2194 = vsub.f32 1.0, %v2130
        %v2195 = vsub.f32 1.0, %v2131
        %v2196 = vsub.f32 1.0, %v2132
        %v2197 = vsub.f32 1.0, %v2133
        %v2198 = vsub.f32 1.0, %v2134
        %v2199 = vsub.f32 1.0, %v2135
        %v2200 = vsub.f32 1.0, %v2136
        %v2201 = vsub.f32 1.0, %v2137
        %v2202 = vsub.f32 1.0, %v2138
        %v2203 = vsub.f32 1.0, %v2139
        %v2204 = vsub.f32 1.0, %v2140
        %v2205 = vsub.f32 1.0, %v2141
        %v2206 = vsub.f32 1.0, %v2142
        %v2207 = vsub.f32 1.0, %v2143
        %v2208 = vsub.f32 1.0, %v2144
        %v2209 = vsub.f32 1.0, %v2145
        %v2210 = vsub.f32 1.0, %v2146
        %v2211 = vsub.f32 1.0, %v2147
        %v2212 = vsub.f32 1.0, %v2148
        %v2213 = vsub.f32 1.0, %v2149
        %v2214 = vsub.f32 1.0, %v2150
        %v2215 = vsub.f32 1.0, %v2151
        %v2216 = vsub.f32 1.0, %v2152
        %v2217 = vsub.f32 1.0, %v2153
        %v2218 = vsub.f32 1.0, %v2154
        %v2219 = vsub.f32 1.0, %v2155
        %v2220 = vsub.f32 1.0, %v2156
        %v2221 = vsub.f32 1.0, %v2157
        %v2222 = vsub.f32 1.0, %v2158
        %v2223 = vsub.f32 1.0, %v2159
        %v2224 = vsub.f32 1.0, %v2160
        %v2225 = vsub.f32 1.0, %v2161
        %v2226 = vsub.f32 1.0, %v2162
        %v2227 = vsub.f32 1.0, %v2163
        %v2228 = vsub.f32 1.0, %v2164
        %v2229 = vsub.f32 1.0, %v2165
        %v2230 = vsub.f32 1.0, %v2166
        %v2231 = vsub.f32 1.0, %v2167
        %v2232 = vsub.f32 1.0, %v2168
        %v2233 = vsub.f32 1.0, %v2169
        %v2234 = vsub.f32 1.0, %v2170
        %v2235 = vsub.f32 1.0, %v2171
        %v2236 = vsub.f32 1.0, %v2172
        %v2237 = vsub.f32 1.0, %v2173
        %v2238 = vsub.f32 1.0, %v2174
        %v2239 = vsub.f32 1.0, %v2175
        %v2240 = vsub.f32 1.0, %v2176
        %v2241 = vmul.f32 %v897, %v2177
        %v2242 = vmul.f32 %v898, %v2178
        %v2243 = vmul.f32 %v899, %v2179
        %v2244 = vmul.f32 %v900, %v2180
        %v2245 = vmul.f32 %v901, %v2181
        %v2246 = vmul.f32 %v902, %v2182
        %v2247 = vmul.f32 %v903, %v2183
        %v2248 = vmul.f32 %v904, %v2184
        %v2249 = vmul.f32 %v905, %v2185
        %v2250 = vmul.f32 %v906, %v2186
        %v2251 = vmul.f32 %v907, %v2187
        %v2252 = vmul.f32 %v908, %v2188
        %v2253 = vmul.f32 %v909, %v2189
        %v2254 = vmul.f32 %v910, %v2190
        %v2255 = vmul.f32 %v911, %v2191
        %v2256 = vmul.f32 %v912, %v2192
        %v2257 = vmul.f32 %v913, %v2193
        %v2258 = vmul.f32 %v914, %v2194
        %v2259 = vmul.f32 %v915, %v2195
        %v2260 = vmul.f32 %v916, %v2196
        %v2261 = vmul.f32 %v917, %v2197
        %v2262 = vmul.f32 %v918, %v2198
        %v2263 = vmul.f32 %v919, %v2199
        %v2264 = vmul.f32 %v920, %v2200
        %v2265 = vmul.f32 %v921, %v2201
        %v2266 = vmul.f32 %v922, %v2202
        %v2267 = vmul.f32 %v923, %v2203
        %v2268 = vmul.f32 %v924, %v2204
        %v2269 = vmul.f32 %v925, %v2205
        %v2270 = vmul.f32 %v926, %v2206
        %v2271 = vmul.f32 %v927, %v2207
        %v2272 = vmul.f32 %v928, %v2208
        %v2273 = vmul.f32 %v929, %v2209
        %v2274 = vmul.f32 %v930, %v2210
        %v2275 = vmul.f32 %v931, %v2211
        %v2276 = vmul.f32 %v932, %v2212
        %v2277 = vmul.f32 %v933, %v2213
        %v2278 = vmul.f32 %v934, %v2214
        %v2279 = vmul.f32 %v935, %v2215
        %v2280 = vmul.f32 %v936, %v2216
        %v2281 = vmul.f32 %v937, %v2217
        %v2282 = vmul.f32 %v938, %v2218
        %v2283 = vmul.f32 %v939, %v2219
        %v2284 = vmul.f32 %v940, %v2220
        %v2285 = vmul.f32 %v941, %v2221
        %v2286 = vmul.f32 %v942, %v2222
        %v2287 = vmul.f32 %v943, %v2223
        %v2288 = vmul.f32 %v944, %v2224
        %v2289 = vmul.f32 %v945, %v2225
        %v2290 = vmul.f32 %v946, %v2226
        %v2291 = vmul.f32 %v947, %v2227
        %v2292 = vmul.f32 %v948, %v2228
        %v2293 = vmul.f32 %v949, %v2229
        %v2294 = vmul.f32 %v950, %v2230
        %v2295 = vmul.f32 %v951, %v2231
        %v2296 = vmul.f32 %v952, %v2232
        %v2297 = vmul.f32 %v953, %v2233
        %v2298 = vmul.f32 %v954, %v2234
        %v2299 = vmul.f32 %v955, %v2235
        %v2300 = vmul.f32 %v956, %v2236
        %v2301 = vmul.f32 %v957, %v2237
        %v2302 = vmul.f32 %v958, %v2238
        %v2303 = vmul.f32 %v959, %v2239
        %v2304 = vmul.f32 %v960, %v2240
        %v2305 = vadd.f32 %v2241, 1.0
        %v2306 = vadd.f32 %v2242, 1.0
        %v2307 = vadd.f32 %v2243, 1.0
        %v2308 = vadd.f32 %v2244, 1.0
        %v2309 = vadd.f32 %v2245, 1.0
        %v2310 = vadd.f32 %v2246, 1.0
        %v2311 = vadd.f32 %v2247, 1.0
        %v2312 = vadd.f32 %v2248, 1.0
        %v2313 = vadd.f32 %v2249, 1.0
        %v2314 = vadd.f32 %v2250, 1.0
        %v2315 = vadd.f32 %v2251, 1.0
        %v2316 = vadd.f32 %v2252, 1.0
        %v2317 = vadd.f32 %v2253, 1.0
        %v2318 = vadd.f32 %v2254, 1.0
        %v2319 = vadd.f32 %v2255, 1.0
        %v2320 = vadd.f32 %v2256, 1.0
        %v2321 = vadd.f32 %v2257, 1.0
        %v2322 = vadd.f32 %v2258, 1.0
        %v2323 = vadd.f32 %v2259, 1.0
        %v2324 = vadd.f32 %v2260, 1.0
        %v2325 = vadd.f32 %v2261, 1.0
        %v2326 = vadd.f32 %v2262, 1.0
        %v2327 = vadd.f32 %v2263, 1.0
        %v2328 = vadd.f32 %v2264, 1.0
        %v2329 = vadd.f32 %v2265, 1.0
        %v2330 = vadd.f32 %v2266, 1.0
        %v2331 = vadd.f32 %v2267, 1.0
        %v2332 = vadd.f32 %v2268, 1.0
        %v2333 = vadd.f32 %v2269, 1.0
        %v2334 = vadd.f32 %v2270, 1.0
        %v2335 = vadd.f32 %v2271, 1.0
        %v2336 = vadd.f32 %v2272, 1.0
        %v2337 = vadd.f32 %v2273, 1.0
        %v2338 = vadd.f32 %v2274, 1.0
        %v2339 = vadd.f32 %v2275, 1.0
        %v2340 = vadd.f32 %v2276, 1.0
        %v2341 = vadd.f32 %v2277, 1.0
        %v2342 = vadd.f32 %v2278, 1.0
        %v2343 = vadd.f32 %v2279, 1.0
        %v2344 = vadd.f32 %v2280, 1.0
        %v2345 = vadd.f32 %v2281, 1.0
        %v2346 = vadd.f32 %v2282, 1.0
        %v2347 = vadd.f32 %v2283, 1.0
        %v2348 = vadd.f32 %v2284, 1.0
        %v2349 = vadd.f32 %v2285, 1.0
        %v2350 = vadd.f32 %v2286, 1.0
        %v2351 = vadd.f32 %v2287, 1.0
        %v2352 = vadd.f32 %v2288, 1.0
        %v2353 = vadd.f32 %v2289, 1.0
        %v2354 = vadd.f32 %v2290, 1.0
        %v2355 = vadd.f32 %v2291, 1.0
        %v2356 = vadd.f32 %v2292, 1.0
        %v2357 = vadd.f32 %v2293, 1.0
        %v2358 = vadd.f32 %v2294, 1.0
        %v2359 = vadd.f32 %v2295, 1.0
        %v2360 = vadd.f32 %v2296, 1.0
        %v2361 = vadd.f32 %v2297, 1.0
        %v2362 = vadd.f32 %v2298, 1.0
        %v2363 = vadd.f32 %v2299, 1.0
        %v2364 = vadd.f32 %v2300, 1.0
        %v2365 = vadd.f32 %v2301, 1.0
        %v2366 = vadd.f32 %v2302, 1.0
        %v2367 = vadd.f32 %v2303, 1.0
        %v2368 = vadd.f32 %v2304, 1.0
        %v2369 = vmul.f32 %v705, %v2305
        %v2370 = vmul.f32 %v706, %v2306
        %v2371 = vmul.f32 %v707, %v2307
        %v2372 = vmul.f32 %v708, %v2308
        %v2373 = vmul.f32 %v709, %v2309
        %v2374 = vmul.f32 %v710, %v2310
        %v2375 = vmul.f32 %v711, %v2311
        %v2376 = vmul.f32 %v712, %v2312
        %v2377 = vmul.f32 %v713, %v2313
        %v2378 = vmul.f32 %v714, %v2314
        %v2379 = vmul.f32 %v715, %v2315
        %v2380 = vmul.f32 %v716, %v2316
        %v2381 = vmul.f32 %v717, %v2317
        %v2382 = vmul.f32 %v718, %v2318
        %v2383 = vmul.f32 %v719, %v2319
        %v2384 = vmul.f32 %v720, %v2320
        %v2385 = vmul.f32 %v721, %v2321
        %v2386 = vmul.f32 %v722, %v2322
        %v2387 = vmul.f32 %v723, %v2323
        %v2388 = vmul.f32 %v724, %v2324
        %v2389 = vmul.f32 %v725, %v2325
        %v2390 = vmul.f32 %v726, %v2326
        %v2391 = vmul.f32 %v727, %v2327
        %v2392 = vmul.f32 %v728, %v2328
        %v2393 = vmul.f32 %v729, %v2329
        %v2394 = vmul.f32 %v730, %v2330
        %v2395 = vmul.f32 %v731, %v2331
        %v2396 = vmul.f32 %v732, %v2332
        %v2397 = vmul.f32 %v733, %v2333
        %v2398 = vmul.f32 %v734, %v2334
        %v2399 = vmul.f32 %v735, %v2335
        %v2400 = vmul.f32 %v736, %v2336
        %v2401 = vmul.f32 %v737, %v2337
        %v2402 = vmul.f32 %v738, %v2338
        %v2403 = vmul.f32 %v739, %v2339
        %v2404 = vmul.f32 %v740, %v2340
        %v2405 = vmul.f32 %v741, %v2341
        %v2406 = vmul.f32 %v742, %v2342
        %v2407 = vmul.f32 %v743, %v2343
        %v2408 = vmul.f32 %v744, %v2344
        %v2409 = vmul.f32 %v745, %v2345
        %v2410 = vmul.f32 %v746, %v2346
        %v2411 = vmul.f32 %v747, %v2347
        %v2412 = vmul.f32 %v748, %v2348
        %v2413 = vmul.f32 %v749, %v2349
        %v2414 = vmul.f32 %v750, %v2350
        %v2415 = vmul.f32 %v751, %v2351
        %v2416 = vmul.f32 %v752, %v2352
        %v2417 = vmul.f32 %v753, %v2353
        %v2418 = vmul.f32 %v754, %v2354
        %v2419 = vmul.f32 %v755, %v2355
        %v2420 = vmul.f32 %v756, %v2356
        %v2421 = vmul.f32 %v757, %v2357
        %v2422 = vmul.f32 %v758, %v2358
        %v2423 = vmul.f32 %v759, %v2359
        %v2424 = vmul.f32 %v760, %v2360
        %v2425 = vmul.f32 %v761, %v2361
        %v2426 = vmul.f32 %v762, %v2362
        %v2427 = vmul.f32 %v763, %v2363
        %v2428 = vmul.f32 %v764, %v2364
        %v2429 = vmul.f32 %v765, %v2365
        %v2430 = vmul.f32 %v766, %v2366
        %v2431 = vmul.f32 %v767, %v2367
        %v2432 = vmul.f32 %v768, %v2368
        %v2433 = vpack.c.bf16 %v2371, %v2369
        %v2434 = vpack.c.bf16 %v2372, %v2370
        %v2435 = vpack.c.bf16 %v2375, %v2373
        %v2436 = vpack.c.bf16 %v2376, %v2374
        %v2437 = vpack.c.bf16 %v2379, %v2377
        %v2438 = vpack.c.bf16 %v2380, %v2378
        %v2439 = vpack.c.bf16 %v2383, %v2381
        %v2440 = vpack.c.bf16 %v2384, %v2382
        %v2441 = vpack.c.bf16 %v2387, %v2385
        %v2442 = vpack.c.bf16 %v2388, %v2386
        %v2443 = vpack.c.bf16 %v2391, %v2389
        %v2444 = vpack.c.bf16 %v2392, %v2390
        %v2445 = vpack.c.bf16 %v2395, %v2393
        %v2446 = vpack.c.bf16 %v2396, %v2394
        %v2447 = vpack.c.bf16 %v2399, %v2397
        %v2448 = vpack.c.bf16 %v2400, %v2398
        %v2449 = vpack.c.bf16 %v2403, %v2401
        %v2450 = vpack.c.bf16 %v2404, %v2402
        %v2451 = vpack.c.bf16 %v2407, %v2405
        %v2452 = vpack.c.bf16 %v2408, %v2406
        %v2453 = vpack.c.bf16 %v2411, %v2409
        %v2454 = vpack.c.bf16 %v2412, %v2410
        %v2455 = vpack.c.bf16 %v2415, %v2413
        %v2456 = vpack.c.bf16 %v2416, %v2414
        %v2457 = vpack.c.bf16 %v2419, %v2417
        %v2458 = vpack.c.bf16 %v2420, %v2418
        %v2459 = vpack.c.bf16 %v2423, %v2421
        %v2460 = vpack.c.bf16 %v2424, %v2422
        %v2461 = vpack.c.bf16 %v2427, %v2425
        %v2462 = vpack.c.bf16 %v2428, %v2426
        %v2463 = vpack.c.bf16 %v2431, %v2429
        %v2464 = vpack.c.bf16 %v2432, %v2430
        %v2465 = vld [vmem:[%s305] sm:$0xf]
        %v2466 = vld [vmem:[%s305 + $0x4] sm:$0xf]
        %v2467 = vld [vmem:[%s305 + $0x8] sm:$0xf]
        %v2468 = vld [vmem:[%s305 + $0xc] sm:$0xf]
        %v2469 = vld [vmem:[%s305 + $0x10] sm:$0xf]
        %v2470 = vld [vmem:[%s305 + $0x14] sm:$0xf]
        %v2471 = vld [vmem:[%s305 + $0x18] sm:$0xf]
        %v2472 = vld [vmem:[%s305 + $0x1c] sm:$0xf]
        %v2473 = vld [vmem:[%s305 + $0x20] sm:$0xf]
        %v2474 = vld [vmem:[%s305 + $0x24] sm:$0xf]
        %v2475 = vld [vmem:[%s305 + $0x28] sm:$0xf]
        %v2476 = vld [vmem:[%s305 + $0x2c] sm:$0xf]
        %v2477 = vld [vmem:[%s305 + $0x30] sm:$0xf]
        %v2478 = vld [vmem:[%s305 + $0x34] sm:$0xf]
        %v2479 = vld [vmem:[%s305 + $0x38] sm:$0xf]
        %v2480 = vld [vmem:[%s305 + $0x3c] sm:$0xf]
        %v2481 = vld [vmem:[%s305 + $0x40] sm:$0xf]
        %v2482 = vld [vmem:[%s305 + $0x44] sm:$0xf]
        %v2483 = vld [vmem:[%s305 + $0x48] sm:$0xf]
        %v2484 = vld [vmem:[%s305 + $0x4c] sm:$0xf]
        %v2485 = vld [vmem:[%s305 + $0x50] sm:$0xf]
        %v2486 = vld [vmem:[%s305 + $0x54] sm:$0xf]
        %v2487 = vld [vmem:[%s305 + $0x58] sm:$0xf]
        %v2488 = vld [vmem:[%s305 + $0x5c] sm:$0xf]
        %v2489 = vld [vmem:[%s305 + $0x60] sm:$0xf]
        %v2490 = vld [vmem:[%s305 + $0x64] sm:$0xf]
        %v2491 = vld [vmem:[%s305 + $0x68] sm:$0xf]
        %v2492 = vld [vmem:[%s305 + $0x6c] sm:$0xf]
        %v2493 = vld [vmem:[%s305 + $0x70] sm:$0xf]
        %v2494 = vld [vmem:[%s305 + $0x74] sm:$0xf]
        %v2495 = vld [vmem:[%s305 + $0x78] sm:$0xf]
        %v2496 = vld [vmem:[%s305 + $0x7c] sm:$0xf]
        %v2529 = vunpack.c.l.b16 %v2465
        %v2530 = vunpack.c.l.b16 %v2466
        %v2531 = vunpack.c.l.b16 %v2467
        %v2532 = vunpack.c.l.b16 %v2468
        %v2533 = vunpack.c.l.b16 %v2469
        %v2534 = vunpack.c.l.b16 %v2470
        %v2535 = vunpack.c.l.b16 %v2471
        %v2536 = vunpack.c.l.b16 %v2472
        %v2537 = vunpack.c.l.b16 %v2473
        %v2538 = vunpack.c.l.b16 %v2474
        %v2539 = vunpack.c.l.b16 %v2475
        %v2540 = vunpack.c.l.b16 %v2476
        %v2541 = vunpack.c.l.b16 %v2477
        %v2542 = vunpack.c.l.b16 %v2478
        %v2543 = vunpack.c.l.b16 %v2479
        %v2544 = vunpack.c.l.b16 %v2480
        %v2545 = vunpack.c.l.b16 %v2481
        %v2546 = vunpack.c.l.b16 %v2482
        %v2547 = vunpack.c.l.b16 %v2483
        %v2548 = vunpack.c.l.b16 %v2484
        %v2549 = vunpack.c.l.b16 %v2485
        %v2550 = vunpack.c.l.b16 %v2486
        %v2551 = vunpack.c.l.b16 %v2487
        %v2552 = vunpack.c.l.b16 %v2488
        %v2553 = vunpack.c.l.b16 %v2489
        %v2554 = vunpack.c.l.b16 %v2490
        %v2555 = vunpack.c.l.b16 %v2491
        %v2556 = vunpack.c.l.b16 %v2492
        %v2557 = vunpack.c.l.b16 %v2493
        %v2558 = vunpack.c.l.b16 %v2494
        %v2559 = vunpack.c.l.b16 %v2495
        %v2560 = vunpack.c.l.b16 %v2496
        %v2561 = vpack.c.b16 %v2530, %v2529
        %v2562 = vpack.c.b16 %v2532, %v2531
        %v2563 = vpack.c.b16 %v2534, %v2533
        %v2564 = vpack.c.b16 %v2536, %v2535
        %v2565 = vpack.c.b16 %v2538, %v2537
        %v2566 = vpack.c.b16 %v2540, %v2539
        %v2567 = vpack.c.b16 %v2542, %v2541
        %v2568 = vpack.c.b16 %v2544, %v2543
        %v2569 = vpack.c.b16 %v2546, %v2545
        %v2570 = vpack.c.b16 %v2548, %v2547
        %v2571 = vpack.c.b16 %v2550, %v2549
        %v2572 = vpack.c.b16 %v2552, %v2551
        %v2573 = vpack.c.b16 %v2554, %v2553
        %v2574 = vpack.c.b16 %v2556, %v2555
        %v2575 = vpack.c.b16 %v2558, %v2557
        %v2576 = vpack.c.b16 %v2560, %v2559
        %2593 = vmatprep.subr.bf16.mxu0 0
        %2594 = vmatpush1.bf16.msra.mxu0 %v2561
        %2595 = vmatprep.subr.bf16.mxu0 0
        %2596 = vmatpush1.bf16.msra.mxu0 %v2562
        %2597 = vmatprep.subr.bf16.mxu0 0
        %2598 = vmatpush1.bf16.msra.mxu0 %v2563
        %2599 = vmatprep.subr.bf16.mxu0 0
        %2600 = vmatpush1.bf16.msra.mxu0 %v2564
        %2601 = vmatprep.subr.bf16.mxu0 0
        %2602 = vmatpush1.bf16.msra.mxu0 %v2565
        %2603 = vmatprep.subr.bf16.mxu0 0
        %2604 = vmatpush1.bf16.msra.mxu0 %v2566
        %2605 = vmatprep.subr.bf16.mxu0 0
        %2606 = vmatpush1.bf16.msra.mxu0 %v2567
        %2607 = vmatprep.subr.bf16.mxu0 0
        %2608 = vmatpush1.bf16.msra.mxu0 %v2568
        %2609 = vmatprep.subr.bf16.mxu0 0
        %2610 = vmatpush1.bf16.msra.mxu0 %v2569
        %2611 = vmatprep.subr.bf16.mxu0 0
        %2612 = vmatpush1.bf16.msra.mxu0 %v2570
        %2613 = vmatprep.subr.bf16.mxu0 0
        %2614 = vmatpush1.bf16.msra.mxu0 %v2571
        %2615 = vmatprep.subr.bf16.mxu0 0
        %2616 = vmatpush1.bf16.msra.mxu0 %v2572
        %2617 = vmatprep.subr.bf16.mxu0 0
        %2618 = vmatpush1.bf16.msra.mxu0 %v2573
        %2619 = vmatprep.subr.bf16.mxu0 0
        %2620 = vmatpush1.bf16.msra.mxu0 %v2574
        %2621 = vmatprep.subr.bf16.mxu0 0
        %2622 = vmatpush1.bf16.msra.mxu0 %v2575
        %2623 = vmatprep.subr.bf16.mxu0 0
        %2624 = vmatpush1.bf16.msra.mxu0 %v2576
        %2625 = vmatprep.mubr.bf16.mxu0 %v2434
        %2626 = vmatmul.mubr.bf16.gmra.mrb[0].mxu0 %v2433
        %v2627 = vpop.f32.mrb[0].mxu0
        %v2628 = vadd.f32 0.0, %v2627
        %v2629 = vpop.f32.mrb[0].mxu0
        %v2630 = vpop.f32.mrb[0].mxu0
        %v2631 = vadd.f32 0.0, %v2630
        %v2632 = vpop.f32.mrb[0].mxu0
        %2633 = vmatprep.mubr.bf16.mxu0 %v2436
        %2634 = vmatmul.mubr.bf16.gmra.mrb[0].mxu0 %v2435
        %v2635 = vpop.f32.mrb[0].mxu0
        %v2636 = vadd.f32 0.0, %v2635
        %v2637 = vpop.f32.mrb[0].mxu0
        %v2638 = vpop.f32.mrb[0].mxu0
        %v2639 = vadd.f32 0.0, %v2638
        %v2640 = vpop.f32.mrb[0].mxu0
        %2641 = vmatprep.mubr.bf16.mxu0 %v2438
        %2642 = vmatmul.mubr.bf16.gmra.mrb[0].mxu0 %v2437
        %v2643 = vpop.f32.mrb[0].mxu0
        %v2644 = vadd.f32 0.0, %v2643
        %v2645 = vpop.f32.mrb[0].mxu0
        %v2646 = vpop.f32.mrb[0].mxu0
        %v2647 = vadd.f32 0.0, %v2646
        %v2648 = vpop.f32.mrb[0].mxu0
        %2649 = vmatprep.mubr.bf16.mxu0 %v2440
        %2650 = vmatmul.mubr.bf16.gmra.mrb[0].mxu0 %v2439
        %v2651 = vpop.f32.mrb[0].mxu0
        %v2652 = vadd.f32 0.0, %v2651
        %v2653 = vpop.f32.mrb[0].mxu0
        %v2654 = vpop.f32.mrb[0].mxu0
        %v2655 = vadd.f32 0.0, %v2654
        %v2656 = vpop.f32.mrb[0].mxu0
        %2657 = vmatprep.mubr.bf16.mxu0 %v2442
        %2658 = vmatmul.mubr.bf16.gmra.mrb[0].mxu0 %v2441
        %v2659 = vpop.f32.mrb[0].mxu0
        %v2660 = vadd.f32 0.0, %v2659
        %v2661 = vpop.f32.mrb[0].mxu0
        %v2662 = vpop.f32.mrb[0].mxu0
        %v2663 = vadd.f32 0.0, %v2662
        %v2664 = vpop.f32.mrb[0].mxu0
        %2665 = vmatprep.mubr.bf16.mxu0 %v2444
        %2666 = vmatmul.mubr.bf16.gmra.mrb[0].mxu0 %v2443
        %v2667 = vpop.f32.mrb[0].mxu0
        %v2668 = vadd.f32 0.0, %v2667
        %v2669 = vpop.f32.mrb[0].mxu0
        %v2670 = vpop.f32.mrb[0].mxu0
        %v2671 = vadd.f32 0.0, %v2670
        %v2672 = vpop.f32.mrb[0].mxu0
        %2673 = vmatprep.mubr.bf16.mxu0 %v2446
        %2674 = vmatmul.mubr.bf16.gmra.mrb[0].mxu0 %v2445
        %v2675 = vpop.f32.mrb[0].mxu0
        %v2676 = vadd.f32 0.0, %v2675
        %v2677 = vpop.f32.mrb[0].mxu0
        %v2678 = vpop.f32.mrb[0].mxu0
        %v2679 = vadd.f32 0.0, %v2678
        %v2680 = vpop.f32.mrb[0].mxu0
        %2681 = vmatprep.mubr.bf16.mxu0 %v2448
        %2682 = vmatmul.mubr.bf16.gmra.mrb[0].mxu0 %v2447
        %v2683 = vpop.f32.mrb[0].mxu0
        %v2684 = vadd.f32 0.0, %v2683
        %v2685 = vpop.f32.mrb[0].mxu0
        %v2686 = vpop.f32.mrb[0].mxu0
        %v2687 = vadd.f32 0.0, %v2686
        %v2688 = vpop.f32.mrb[0].mxu0
        %2689 = vmatprep.mubr.bf16.mxu0 %v2450
        %2690 = vmatmul.mubr.bf16.gmra.mrb[0].mxu0 %v2449
        %v2691 = vpop.f32.mrb[0].mxu0
        %v2692 = vadd.f32 0.0, %v2691
        %v2693 = vpop.f32.mrb[0].mxu0
        %v2694 = vpop.f32.mrb[0].mxu0
        %v2695 = vadd.f32 0.0, %v2694
        %v2696 = vpop.f32.mrb[0].mxu0
        %2697 = vmatprep.mubr.bf16.mxu0 %v2452
        %2698 = vmatmul.mubr.bf16.gmra.mrb[0].mxu0 %v2451
        %v2699 = vpop.f32.mrb[0].mxu0
        %v2700 = vadd.f32 0.0, %v2699
        %v2701 = vpop.f32.mrb[0].mxu0
        %v2702 = vpop.f32.mrb[0].mxu0
        %v2703 = vadd.f32 0.0, %v2702
        %v2704 = vpop.f32.mrb[0].mxu0
        %2705 = vmatprep.mubr.bf16.mxu0 %v2454
        %2706 = vmatmul.mubr.bf16.gmra.mrb[0].mxu0 %v2453
        %v2707 = vpop.f32.mrb[0].mxu0
        %v2708 = vadd.f32 0.0, %v2707
        %v2709 = vpop.f32.mrb[0].mxu0
        %v2710 = vpop.f32.mrb[0].mxu0
        %v2711 = vadd.f32 0.0, %v2710
        %v2712 = vpop.f32.mrb[0].mxu0
        %2713 = vmatprep.mubr.bf16.mxu0 %v2456
        %2714 = vmatmul.mubr.bf16.gmra.mrb[0].mxu0 %v2455
        %v2715 = vpop.f32.mrb[0].mxu0
        %v2716 = vadd.f32 0.0, %v2715
        %v2717 = vpop.f32.mrb[0].mxu0
        %v2718 = vpop.f32.mrb[0].mxu0
        %v2719 = vadd.f32 0.0, %v2718
        %v2720 = vpop.f32.mrb[0].mxu0
        %2721 = vmatprep.mubr.bf16.mxu0 %v2458
        %2722 = vmatmul.mubr.bf16.gmra.mrb[0].mxu0 %v2457
        %v2723 = vpop.f32.mrb[0].mxu0
        %v2724 = vadd.f32 0.0, %v2723
        %v2725 = vpop.f32.mrb[0].mxu0
        %v2726 = vpop.f32.mrb[0].mxu0
        %v2727 = vadd.f32 0.0, %v2726
        %v2728 = vpop.f32.mrb[0].mxu0
        %2729 = vmatprep.mubr.bf16.mxu0 %v2460
        %2730 = vmatmul.mubr.bf16.gmra.mrb[0].mxu0 %v2459
        %v2731 = vpop.f32.mrb[0].mxu0
        %v2732 = vadd.f32 0.0, %v2731
        %v2733 = vpop.f32.mrb[0].mxu0
        %v2734 = vpop.f32.mrb[0].mxu0
        %v2735 = vadd.f32 0.0, %v2734
        %v2736 = vpop.f32.mrb[0].mxu0
        %2737 = vmatprep.mubr.bf16.mxu0 %v2462
        %2738 = vmatmul.mubr.bf16.gmra.mrb[0].mxu0 %v2461
        %v2739 = vpop.f32.mrb[0].mxu0
        %v2740 = vadd.f32 0.0, %v2739
        %v2741 = vpop.f32.mrb[0].mxu0
        %v2742 = vpop.f32.mrb[0].mxu0
        %v2743 = vadd.f32 0.0, %v2742
        %v2744 = vpop.f32.mrb[0].mxu0
        %2745 = vmatprep.mubr.bf16.mxu0 %v2464
        %2746 = vmatmul.mubr.bf16.gmra.mrb[0].mxu0 %v2463
        %v2747 = vpop.f32.mrb[0].mxu0
        %v2748 = vadd.f32 0.0, %v2747
        %v2749 = vpop.f32.mrb[0].mxu0
        %v2750 = vpop.f32.mrb[0].mxu0
        %v2751 = vadd.f32 0.0, %v2750
        %v2752 = vpop.f32.mrb[0].mxu0
        %2753 = vdwg.mxu0
        %p2754 = scmp.eq.s32.totalorder %s30, 0
        // Predicated region
        $region53: #{tpu_custom_call.1} parent=39 // pred_check
          %p2755 = pneg %p2754
        $region54: #{tpu_custom_call.1} parent=39 // pred_check_branch
          %2757 = sbr.rel (%p2755) target = $region56
        $region55: #{tpu_custom_call.1} parent=39 // pred_region
          %2758 = vst [vmem:[#allocation2] sm:$0xff] %v2628
          %2759 = vst [vmem:[#allocation2 + $0x8] sm:$0xff] %v2631
          %2760 = vst [vmem:[#allocation2 + $0x10] sm:$0xff] %v2636
          %2761 = vst [vmem:[#allocation2 + $0x18] sm:$0xff] %v2639
          %2762 = vst [vmem:[#allocation2 + $0x20] sm:$0xff] %v2644
          %2763 = vst [vmem:[#allocation2 + $0x28] sm:$0xff] %v2647
          %2764 = vst [vmem:[#allocation2 + $0x30] sm:$0xff] %v2652
          %2765 = vst [vmem:[#allocation2 + $0x38] sm:$0xff] %v2655
          %2766 = vst [vmem:[#allocation2 + $0x40] sm:$0xff] %v2660
          %2767 = vst [vmem:[#allocation2 + $0x48] sm:$0xff] %v2663
          %2768 = vst [vmem:[#allocation2 + $0x50] sm:$0xff] %v2668
          %2769 = vst [vmem:[#allocation2 + $0x58] sm:$0xff] %v2671
          %2770 = vst [vmem:[#allocation2 + $0x60] sm:$0xff] %v2676
          %2771 = vst [vmem:[#allocation2 + $0x68] sm:$0xff] %v2679
          %2772 = vst [vmem:[#allocation2 + $0x70] sm:$0xff] %v2684
          %2773 = vst [vmem:[#allocation2 + $0x78] sm:$0xff] %v2687
          %2774 = vst [vmem:[#allocation2 + $0x80] sm:$0xff] %v2692
          %2775 = vst [vmem:[#allocation2 + $0x88] sm:$0xff] %v2695
          %2776 = vst [vmem:[#allocation2 + $0x90] sm:$0xff] %v2700
          %2777 = vst [vmem:[#allocation2 + $0x98] sm:$0xff] %v2703
          %2778 = vst [vmem:[#allocation2 + $0xa0] sm:$0xff] %v2708
          %2779 = vst [vmem:[#allocation2 + $0xa8] sm:$0xff] %v2711
          %2780 = vst [vmem:[#allocation2 + $0xb0] sm:$0xff] %v2716
          %2781 = vst [vmem:[#allocation2 + $0xb8] sm:$0xff] %v2719
          %2782 = vst [vmem:[#allocation2 + $0xc0] sm:$0xff] %v2724
          %2783 = vst [vmem:[#allocation2 + $0xc8] sm:$0xff] %v2727
          %2784 = vst [vmem:[#allocation2 + $0xd0] sm:$0xff] %v2732
          %2785 = vst [vmem:[#allocation2 + $0xd8] sm:$0xff] %v2735
          %2786 = vst [vmem:[#allocation2 + $0xe0] sm:$0xff] %v2740
          %2787 = vst [vmem:[#allocation2 + $0xe8] sm:$0xff] %v2743
          %2788 = vst [vmem:[#allocation2 + $0xf0] sm:$0xff] %v2748
          %2789 = vst [vmem:[#allocation2 + $0xf8] sm:$0xff] %v2751
        $region56: #{tpu_custom_call.1} parent=39 // pred_fallthru
          _
        %p2790 = scmp.gt.s32.totalorder %s30, 0
        // Predicated region
        $region57: #{tpu_custom_call.1} parent=39 // pred_check
          %p2791 = pneg %p2790
        $region58: #{tpu_custom_call.1} parent=39 // pred_check_branch
          %2793 = sbr.rel (%p2791) target = $region60
        $region59: #{tpu_custom_call.1} parent=39 // pred_region
          %v2794 = vld [vmem:[#allocation2] sm:$0xff]
          %v2795 = vld [vmem:[#allocation2 + $0x8] sm:$0xff]
          %v2796 = vld [vmem:[#allocation2 + $0x10] sm:$0xff]
          %v2797 = vld [vmem:[#allocation2 + $0x18] sm:$0xff]
          %v2798 = vld [vmem:[#allocation2 + $0x20] sm:$0xff]
          %v2799 = vld [vmem:[#allocation2 + $0x28] sm:$0xff]
          %v2800 = vld [vmem:[#allocation2 + $0x30] sm:$0xff]
          %v2801 = vld [vmem:[#allocation2 + $0x38] sm:$0xff]
          %v2802 = vld [vmem:[#allocation2 + $0x40] sm:$0xff]
          %v2803 = vld [vmem:[#allocation2 + $0x48] sm:$0xff]
          %v2804 = vld [vmem:[#allocation2 + $0x50] sm:$0xff]
          %v2805 = vld [vmem:[#allocation2 + $0x58] sm:$0xff]
          %v2806 = vld [vmem:[#allocation2 + $0x60] sm:$0xff]
          %v2807 = vld [vmem:[#allocation2 + $0x68] sm:$0xff]
          %v2808 = vld [vmem:[#allocation2 + $0x70] sm:$0xff]
          %v2809 = vld [vmem:[#allocation2 + $0x78] sm:$0xff]
          %v2810 = vld [vmem:[#allocation2 + $0x80] sm:$0xff]
          %v2811 = vld [vmem:[#allocation2 + $0x88] sm:$0xff]
          %v2812 = vld [vmem:[#allocation2 + $0x90] sm:$0xff]
          %v2813 = vld [vmem:[#allocation2 + $0x98] sm:$0xff]
          %v2814 = vld [vmem:[#allocation2 + $0xa0] sm:$0xff]
          %v2815 = vld [vmem:[#allocation2 + $0xa8] sm:$0xff]
          %v2816 = vld [vmem:[#allocation2 + $0xb0] sm:$0xff]
          %v2817 = vld [vmem:[#allocation2 + $0xb8] sm:$0xff]
          %v2818 = vld [vmem:[#allocation2 + $0xc0] sm:$0xff]
          %v2819 = vld [vmem:[#allocation2 + $0xc8] sm:$0xff]
          %v2820 = vld [vmem:[#allocation2 + $0xd0] sm:$0xff]
          %v2821 = vld [vmem:[#allocation2 + $0xd8] sm:$0xff]
          %v2822 = vld [vmem:[#allocation2 + $0xe0] sm:$0xff]
          %v2823 = vld [vmem:[#allocation2 + $0xe8] sm:$0xff]
          %v2824 = vld [vmem:[#allocation2 + $0xf0] sm:$0xff]
          %v2825 = vld [vmem:[#allocation2 + $0xf8] sm:$0xff]
          %v2826 = vadd.f32 %v2794, %v2628
          %v2827 = vadd.f32 %v2795, %v2631
          %v2828 = vadd.f32 %v2796, %v2636
          %v2829 = vadd.f32 %v2797, %v2639
          %v2830 = vadd.f32 %v2798, %v2644
          %v2831 = vadd.f32 %v2799, %v2647
          %v2832 = vadd.f32 %v2800, %v2652
          %v2833 = vadd.f32 %v2801, %v2655
          %v2834 = vadd.f32 %v2802, %v2660
          %v2835 = vadd.f32 %v2803, %v2663
          %v2836 = vadd.f32 %v2804, %v2668
          %v2837 = vadd.f32 %v2805, %v2671
          %v2838 = vadd.f32 %v2806, %v2676
          %v2839 = vadd.f32 %v2807, %v2679
          %v2840 = vadd.f32 %v2808, %v2684
          %v2841 = vadd.f32 %v2809, %v2687
          %v2842 = vadd.f32 %v2810, %v2692
          %v2843 = vadd.f32 %v2811, %v2695
          %v2844 = vadd.f32 %v2812, %v2700
          %v2845 = vadd.f32 %v2813, %v2703
          %v2846 = vadd.f32 %v2814, %v2708
          %v2847 = vadd.f32 %v2815, %v2711
          %v2848 = vadd.f32 %v2816, %v2716
          %v2849 = vadd.f32 %v2817, %v2719
          %v2850 = vadd.f32 %v2818, %v2724
          %v2851 = vadd.f32 %v2819, %v2727
          %v2852 = vadd.f32 %v2820, %v2732
          %v2853 = vadd.f32 %v2821, %v2735
          %v2854 = vadd.f32 %v2822, %v2740
          %v2855 = vadd.f32 %v2823, %v2743
          %v2856 = vadd.f32 %v2824, %v2748
          %v2857 = vadd.f32 %v2825, %v2751
          %2858 = vst [vmem:[#allocation2] sm:$0xff] %v2826
          %2859 = vst [vmem:[#allocation2 + $0x8] sm:$0xff] %v2827
          %2860 = vst [vmem:[#allocation2 + $0x10] sm:$0xff] %v2828
          %2861 = vst [vmem:[#allocation2 + $0x18] sm:$0xff] %v2829
          %2862 = vst [vmem:[#allocation2 + $0x20] sm:$0xff] %v2830
          %2863 = vst [vmem:[#allocation2 + $0x28] sm:$0xff] %v2831
          %2864 = vst [vmem:[#allocation2 + $0x30] sm:$0xff] %v2832
          %2865 = vst [vmem:[#allocation2 + $0x38] sm:$0xff] %v2833
          %2866 = vst [vmem:[#allocation2 + $0x40] sm:$0xff] %v2834
          %2867 = vst [vmem:[#allocation2 + $0x48] sm:$0xff] %v2835
          %2868 = vst [vmem:[#allocation2 + $0x50] sm:$0xff] %v2836
          %2869 = vst [vmem:[#allocation2 + $0x58] sm:$0xff] %v2837
          %2870 = vst [vmem:[#allocation2 + $0x60] sm:$0xff] %v2838
          %2871 = vst [vmem:[#allocation2 + $0x68] sm:$0xff] %v2839
          %2872 = vst [vmem:[#allocation2 + $0x70] sm:$0xff] %v2840
          %2873 = vst [vmem:[#allocation2 + $0x78] sm:$0xff] %v2841
          %2874 = vst [vmem:[#allocation2 + $0x80] sm:$0xff] %v2842
          %2875 = vst [vmem:[#allocation2 + $0x88] sm:$0xff] %v2843
          %2876 = vst [vmem:[#allocation2 + $0x90] sm:$0xff] %v2844
          %2877 = vst [vmem:[#allocation2 + $0x98] sm:$0xff] %v2845
          %2878 = vst [vmem:[#allocation2 + $0xa0] sm:$0xff] %v2846
          %2879 = vst [vmem:[#allocation2 + $0xa8] sm:$0xff] %v2847
          %2880 = vst [vmem:[#allocation2 + $0xb0] sm:$0xff] %v2848
          %2881 = vst [vmem:[#allocation2 + $0xb8] sm:$0xff] %v2849
          %2882 = vst [vmem:[#allocation2 + $0xc0] sm:$0xff] %v2850
          %2883 = vst [vmem:[#allocation2 + $0xc8] sm:$0xff] %v2851
          %2884 = vst [vmem:[#allocation2 + $0xd0] sm:$0xff] %v2852
          %2885 = vst [vmem:[#allocation2 + $0xd8] sm:$0xff] %v2853
          %2886 = vst [vmem:[#allocation2 + $0xe0] sm:$0xff] %v2854
          %2887 = vst [vmem:[#allocation2 + $0xe8] sm:$0xff] %v2855
          %2888 = vst [vmem:[#allocation2 + $0xf0] sm:$0xff] %v2856
          %2889 = vst [vmem:[#allocation2 + $0xf8] sm:$0xff] %v2857
        $region60: #{tpu_custom_call.1} parent=39 // pred_fallthru
          _
        %p2890 = scmp.eq.s32.totalorder %s30, 1
        // Predicated region
        $region61: #{tpu_custom_call.1} parent=39 // pred_check
          %p2891 = pneg %p2890
        $region62: #{tpu_custom_call.1} parent=39 // pred_check_branch
          %2893 = sbr.rel (%p2891) target = $region64
        $region63: #{tpu_custom_call.1} parent=39 // pred_region
          %v2894 = vld [vmem:[#allocation2] sm:$0xff]
          %v2895 = vld [vmem:[#allocation2 + $0x8] sm:$0xff]
          %v2896 = vld [vmem:[#allocation2 + $0x10] sm:$0xff]
          %v2897 = vld [vmem:[#allocation2 + $0x18] sm:$0xff]
          %v2898 = vld [vmem:[#allocation2 + $0x20] sm:$0xff]
          %v2899 = vld [vmem:[#allocation2 + $0x28] sm:$0xff]
          %v2900 = vld [vmem:[#allocation2 + $0x30] sm:$0xff]
          %v2901 = vld [vmem:[#allocation2 + $0x38] sm:$0xff]
          %v2902 = vld [vmem:[#allocation2 + $0x40] sm:$0xff]
          %v2903 = vld [vmem:[#allocation2 + $0x48] sm:$0xff]
          %v2904 = vld [vmem:[#allocation2 + $0x50] sm:$0xff]
          %v2905 = vld [vmem:[#allocation2 + $0x58] sm:$0xff]
          %v2906 = vld [vmem:[#allocation2 + $0x60] sm:$0xff]
          %v2907 = vld [vmem:[#allocation2 + $0x68] sm:$0xff]
          %v2908 = vld [vmem:[#allocation2 + $0x70] sm:$0xff]
          %v2909 = vld [vmem:[#allocation2 + $0x78] sm:$0xff]
          %v2910 = vld [vmem:[#allocation2 + $0x80] sm:$0xff]
          %v2911 = vld [vmem:[#allocation2 + $0x88] sm:$0xff]
          %v2912 = vld [vmem:[#allocation2 + $0x90] sm:$0xff]
          %v2913 = vld [vmem:[#allocation2 + $0x98] sm:$0xff]
          %v2914 = vld [vmem:[#allocation2 + $0xa0] sm:$0xff]
          %v2915 = vld [vmem:[#allocation2 + $0xa8] sm:$0xff]
          %v2916 = vld [vmem:[#allocation2 + $0xb0] sm:$0xff]
          %v2917 = vld [vmem:[#allocation2 + $0xb8] sm:$0xff]
          %v2918 = vld [vmem:[#allocation2 + $0xc0] sm:$0xff]
          %v2919 = vld [vmem:[#allocation2 + $0xc8] sm:$0xff]
          %v2920 = vld [vmem:[#allocation2 + $0xd0] sm:$0xff]
          %v2921 = vld [vmem:[#allocation2 + $0xd8] sm:$0xff]
          %v2922 = vld [vmem:[#allocation2 + $0xe0] sm:$0xff]
          %v2923 = vld [vmem:[#allocation2 + $0xe8] sm:$0xff]
          %v2924 = vld [vmem:[#allocation2 + $0xf0] sm:$0xff]
          %v2925 = vld [vmem:[#allocation2 + $0xf8] sm:$0xff]
          %v2926 = vld [vmem:[%s4] sm:$0x1]
          %v2928 = vlaneseq
          %v2929 = vshrl.u32 %v2928, 7
          %v2930 = vsub.s32 0, %v2929
          %v2931 = vrot.slane %v2926, %v2930
          %v2933 = vadd.f32 %v2894, %v2931
          %v2934 = vadd.f32 %v2895, %v2931
          %v2935 = vadd.f32 %v2896, %v2931
          %v2936 = vadd.f32 %v2897, %v2931
          %v2937 = vadd.f32 %v2898, %v2931
          %v2938 = vadd.f32 %v2899, %v2931
          %v2939 = vadd.f32 %v2900, %v2931
          %v2940 = vadd.f32 %v2901, %v2931
          %v2941 = vadd.f32 %v2902, %v2931
          %v2942 = vadd.f32 %v2903, %v2931
          %v2943 = vadd.f32 %v2904, %v2931
          %v2944 = vadd.f32 %v2905, %v2931
          %v2945 = vadd.f32 %v2906, %v2931
          %v2946 = vadd.f32 %v2907, %v2931
          %v2947 = vadd.f32 %v2908, %v2931
          %v2948 = vadd.f32 %v2909, %v2931
          %v2949 = vadd.f32 %v2910, %v2931
          %v2950 = vadd.f32 %v2911, %v2931
          %v2951 = vadd.f32 %v2912, %v2931
          %v2952 = vadd.f32 %v2913, %v2931
          %v2953 = vadd.f32 %v2914, %v2931
          %v2954 = vadd.f32 %v2915, %v2931
          %v2955 = vadd.f32 %v2916, %v2931
          %v2956 = vadd.f32 %v2917, %v2931
          %v2957 = vadd.f32 %v2918, %v2931
          %v2958 = vadd.f32 %v2919, %v2931
          %v2959 = vadd.f32 %v2920, %v2931
          %v2960 = vadd.f32 %v2921, %v2931
          %v2961 = vadd.f32 %v2922, %v2931
          %v2962 = vadd.f32 %v2923, %v2931
          %v2963 = vadd.f32 %v2924, %v2931
          %v2964 = vadd.f32 %v2925, %v2931
          %2965 = vst [vmem:[%s345] sm:$0xff] %v2933
          %2966 = vst [vmem:[%s345 + $0x8] sm:$0xff] %v2934
          %2967 = vst [vmem:[%s345 + $0x10] sm:$0xff] %v2935
          %2968 = vst [vmem:[%s345 + $0x18] sm:$0xff] %v2936
          %2969 = vst [vmem:[%s345 + $0x20] sm:$0xff] %v2937
          %2970 = vst [vmem:[%s345 + $0x28] sm:$0xff] %v2938
          %2971 = vst [vmem:[%s345 + $0x30] sm:$0xff] %v2939
          %2972 = vst [vmem:[%s345 + $0x38] sm:$0xff] %v2940
          %2973 = vst [vmem:[%s345 + $0x40] sm:$0xff] %v2941
          %2974 = vst [vmem:[%s345 + $0x48] sm:$0xff] %v2942
          %2975 = vst [vmem:[%s345 + $0x50] sm:$0xff] %v2943
          %2976 = vst [vmem:[%s345 + $0x58] sm:$0xff] %v2944
          %2977 = vst [vmem:[%s345 + $0x60] sm:$0xff] %v2945
          %2978 = vst [vmem:[%s345 + $0x68] sm:$0xff] %v2946
          %2979 = vst [vmem:[%s345 + $0x70] sm:$0xff] %v2947
          %2980 = vst [vmem:[%s345 + $0x78] sm:$0xff] %v2948
          %2981 = vst [vmem:[%s345 + $0x80] sm:$0xff] %v2949
          %2982 = vst [vmem:[%s345 + $0x88] sm:$0xff] %v2950
          %2983 = vst [vmem:[%s345 + $0x90] sm:$0xff] %v2951
          %2984 = vst [vmem:[%s345 + $0x98] sm:$0xff] %v2952
          %2985 = vst [vmem:[%s345 + $0xa0] sm:$0xff] %v2953
          %2986 = vst [vmem:[%s345 + $0xa8] sm:$0xff] %v2954
          %2987 = vst [vmem:[%s345 + $0xb0] sm:$0xff] %v2955
          %2988 = vst [vmem:[%s345 + $0xb8] sm:$0xff] %v2956
          %2989 = vst [vmem:[%s345 + $0xc0] sm:$0xff] %v2957
          %2990 = vst [vmem:[%s345 + $0xc8] sm:$0xff] %v2958
          %2991 = vst [vmem:[%s345 + $0xd0] sm:$0xff] %v2959
          %2992 = vst [vmem:[%s345 + $0xd8] sm:$0xff] %v2960
          %2993 = vst [vmem:[%s345 + $0xe0] sm:$0xff] %v2961
          %2994 = vst [vmem:[%s345 + $0xe8] sm:$0xff] %v2962
          %2995 = vst [vmem:[%s345 + $0xf0] sm:$0xff] %v2963
          %2996 = vst [vmem:[%s345 + $0xf8] sm:$0xff] %v2964
        $region64: #{tpu_custom_call.1} parent=39 // pred_fallthru
          _
        %s2997 = sand.u32 %s170, 1
        %s2998 = scalar_lea.sflag [#allocation5], %s2997
        %s2999 = sand.u32 %s170, 1
        %s3000 = smul.addr %s2999, 256
        %s3001 = scalar_lea.vmem [#allocation9], %s3000
        // Predicated region
        $region65: #{tpu_custom_call.1} parent=39 // pred_check
          %p3002 = pneg %p180
        $region66: #{tpu_custom_call.1} parent=39 // pred_check_branch
          %3004 = sbr.rel (%p3002) target = $region68
        $region67: #{tpu_custom_call.1} parent=39 // pred_region
          %s3005 = smul.u32 32, %s29
          %s3007 = ssub.s32 4096, 4096
          %3008 = vsyncadd %s2998, %s3007
          %s3009 = smul.addr %s3005, 128
          %s3010 = scalar_lea.hbm %s5, %s3009
          %s3011 = sshll.u32 %s3001, 4
          %s3012 = int_to_ptr.vmem [resolvable:$true] %s3011
          %3017 = dma.vmem_to_hbm [thread:$0]  %s3012, 4096, %s3010, %s2998, 128, 128, 8
        $region68: #{tpu_custom_call.1} parent=39 // pred_fallthru
          _
      $region40: #{tpu_custom_call.1} parent=5 // pred_fallthru
        _
      %p3018 = scmp.le.s32.totalorder 2, %s20
      // Predicated region
      $region69: #{tpu_custom_call.1} parent=5 // pred_check
        %p3019 = pneg %p3018
      $region70: #{tpu_custom_call.1} parent=5 // pred_check_branch
        %3021 = sbr.rel (%p3019) target = $region72
      $region71: #{tpu_custom_call.1} parent=5 // pred_region
        %s3022 = ssub.s32 %s20, 2
        // Predicated region
        $region73: #{tpu_custom_call.1} parent=71 // pred_check
          %p3023 = pneg %p186
        $region74: #{tpu_custom_call.1} parent=71 // pred_check_branch
          %3025 = sbr.rel (%p3023) target = $region76
        $region75: #{tpu_custom_call.1} parent=71 // pred_region
          %s3026 = sand.u32 %s171, 1
          %s3027 = scalar_lea.sflag [#allocation5], %s3026
          %s3028 = sand.u32 %s171, 1
          %s3029 = smul.addr %s3028, 256
          %s3030 = scalar_lea.vmem [#allocation9], %s3029
          %3031 = dma.done %s3027, 4096
        $region76: #{tpu_custom_call.1} parent=71 // pred_fallthru
          _
      $region72: #{tpu_custom_call.1} parent=5 // pred_fallthru
        _
    $region6: #{tpu_custom_call.1} parent=1 // loop_footer
      %s24 = sadd.s32 1, %s20
    $region7: #{tpu_custom_call.1} parent=1 // loop_footer_branch
      %19 = sbr.rel target = $region3
    $region8: #{tpu_custom_call.1} parent=1 // loop_exit
      _
    %3032 = vsyncpa [#allocation4], 1
    %s3033 = scalar_lea.sflag [#allocation4], 1
    %3034 = vsyncpa %s3033, 1
    %3035 = vsyncpa [#allocation7], 1
    %s3036 = scalar_lea.sflag [#allocation7], 1
    %3037 = vsyncpa %s3036, 1
    %3038 = vsyncpa [#allocation5], 1
    %s3039 = scalar_lea.sflag [#allocation5], 1
    %3040 = vsyncpa %s3039, 1

</llo_original>
